<compile_context>
chip_gen: v7x
topology: tpu7x:2x2x1
jax: 0.10.0
libtpu: 0.0.40
codegen_flags: <defaults>
</compile_context>

<pallas_src>
import functools

import jax
import jax.numpy as jnp
import numpy as np
from jax.experimental import pallas as pl
from jax.experimental.pallas import tpu as pltpu


def _round_up(x, m):
    return (x + m - 1) // m * m


def _pick_tile_rows(H, Wp, C, budget_bytes=12 * 1024 * 1024):
    """Largest row tile (divisor of H) whose working set fits the VMEM budget.

    v7x note: 64 MiB physical VMEM -> use roughly half the v5e/v6e budget.
    """
    for tr in (128, 64, 32, 16, 8, 4, 2, 1):
        if H % tr:
            continue
        brows, m, mm = (tr + 3) * Wp, tr * Wp, (tr + 2) * Wp
        est = (2 * brows * C * 2        # input window block, double-buffered bf16
               + 2 * m * C * 4          # output block, double-buffered f32
               + brows * C * 6          # h (f32) + hb (bf16)
               + mm * 3 * C * 4         # per-kx matmul result (f32)
               + m * C * 4)             # accumulator (f32)
        if est <= budget_bytes:
            return tr
    return 1


def base_branch_kernel(x_ref, w1_ref, w2_ref, b_ref, o_ref, *, tile_rows, Wp):
    # x_ref : (1, 1, (tile_rows+3)*Wp, C) bf16  zero-padded input window
    #                                           (tile body + 3-row halo),
    #                                           spatial rows flattened, stride Wp
    # w1_ref: (C, C)      bf16  fused 1x1 weights   [in, out]
    # w2_ref: (3, C, 3C)  bf16  fused block-diag 3x3 weights, grouped per kx:
    #                           w2_ref[kx][:, ky*C:(ky+1)*C] = tap (ky, kx)
    # b_ref : (1, C)      f32   fused 3x3 bias
    # o_ref : (1, tile_rows*Wp, C) f32  output rows (columns >= W are junk and
    #                                   are sliced off in the wrapper)
    C = w1_ref.shape[0]
    M = tile_rows * Wp                 # output rows in this tile (incl. junk cols)
    MM = M + 2 * Wp                    # rows fed to each per-kx matmul

    xt = x_ref[0, 0]                   # ((tile_rows+3)*Wp, C) bf16

    # Fused 1x1 conv (no bias) + ReLU over the whole window.  Padded zero rows
    # stay exactly zero (no bias, ReLU(0)=0), reproducing the zero padding of
    # the branch activations for the 3x3 stage.
    h = jnp.dot(xt, w1_ref[...], preferred_element_type=jnp.float32)
    hb = jnp.maximum(h, 0.0).astype(jnp.bfloat16)

    # Fused 3x3 conv: one matmul per kx tap column; the 3 ky taps are stacked
    # along the (3C-wide) output dim.  ky*Wp row offsets are multiples of 8 so
    # the result slices below are sublane-aligned; the kx = 1, 2 LHS shifts are
    # the only misaligned slices left (cheap XLU sublane work).
    acc = None
    for kx in range(3):
        r = jnp.dot(hb[kx:kx + MM, :], w2_ref[kx],
                    preferred_element_type=jnp.float32)            # (MM, 3C)
        for ky in range(3):
            term = r[ky * Wp:ky * Wp + M, ky * C:(ky + 1) * C]     # (M, C)
            acc = term if acc is None else acc + term
    acc = acc + b_ref[...]                                         # bias once
    y = jnp.maximum(acc, 0.0)                                      # ReLU (f32)

    # Residual: the un-padded input centre of this tile starts at row Wp + 1.
    # (bf16-rounded input, widened back to f32 for the add.)
    res = xt[Wp + 1:Wp + 1 + M, :].astype(jnp.float32)
    o_ref[0] = (y + res).astype(o_ref.dtype)


def base_branch_forward_nhwc(x_nhwc, w1_k, w2_k, bias_k, *, tile_rows=None):
    """x_nhwc: (N, H, W, C) float32 (NHWC, native layout). Returns (N, H, W, C)."""
    N, H, W, C = x_nhwc.shape
    assert C % 4 == 0, "n_feat must be divisible by 4"
    assert w1_k.shape == (C, C) and w2_k.shape == (3, C, 3 * C)
    assert bias_k.shape == (1, C)

    Wp = _round_up(W + 2, 8)           # flattened row stride, sublane-aligned
    if tile_rows is None:
        tile_rows = _pick_tile_rows(H, Wp, C)
    assert H % tile_rows == 0, "tile_rows must divide H"
    T = H // tile_rows
    brows = (tile_rows + 3) * Wp
    M = tile_rows * Wp

    # Zero-pad (1 top, 2 bottom, 1 left, Wp-W-1 right), cast to bf16 (halves
    # input HBM bytes), and materialise the overlapping per-tile row windows
    # (tile body + 3 halo rows) so plain Blocked BlockSpecs stream them with
    # automatic double-buffering.
    xp = jnp.pad(x_nhwc.astype(jnp.bfloat16),
                 ((0, 0), (1, 2), (1, Wp - W - 1), (0, 0)))        # (N, H+3, Wp, C)
    row_idx = (jnp.arange(T)[:, None] * tile_rows
               + jnp.arange(tile_rows + 3)[None, :])               # (T, tile_rows+3)
    xw = jnp.take(xp, row_idx, axis=1).reshape(N, T, brows, C)

    kernel = functools.partial(base_branch_kernel, tile_rows=tile_rows, Wp=Wp)
    out = pl.pallas_call(
        kernel,
        out_shape=jax.ShapeDtypeStruct((N, H * Wp, C), jnp.float32),
        grid_spec=pltpu.PrefetchScalarGridSpec(
            num_scalar_prefetch=0,
            grid=(N, T),
            in_specs=[
                pl.BlockSpec((1, 1, brows, C), lambda n, t: (n, t, 0, 0)),
                pl.BlockSpec((C, C), lambda n, t: (0, 0)),
                pl.BlockSpec((3, C, 3 * C), lambda n, t: (0, 0, 0)),
                pl.BlockSpec((1, C), lambda n, t: (0, 0)),
            ],
            out_specs=pl.BlockSpec((1, M, C), lambda n, t: (n, t, 0)),
        ),
        compiler_params=pltpu.CompilerParams(
            dimension_semantics=("parallel", "parallel"),
            vmem_limit_bytes=48 * 1024 * 1024),
    )(xw, w1_k, w2_k, bias_k)

    # Drop the junk columns (row stride Wp > W).  A downstream NHWC layer could
    # consume the Wp-strided layout directly and skip this slice entirely.
    return out.reshape(N, H, Wp, C)[:, :, :W, :]


def base_branch_forward(x_nchw, w1_k, w2_k, bias_k, *, tile_rows=None):
    """NCHW wrapper matching the PyTorch module I/O layout."""
    x = jnp.transpose(x_nchw, (0, 2, 3, 1))                        # NHWC
    out = base_branch_forward_nhwc(x, w1_k, w2_k, bias_k, tile_rows=tile_rows)
    return jnp.transpose(out, (0, 3, 1, 2))                        # back to NCHW


def init_params(key, n_feat):
    """Deterministic synthetic parameters, PyTorch (OIHW) layout."""
    C, C4 = n_feat, n_feat // 4
    ks = jax.random.split(key, 16)
    w1_t, v_t, g_t, bias_t = [], [], [], []
    for b in range(4):
        w1_t.append(0.2 * jax.random.normal(ks[4 * b + 0], (C4, C), jnp.float32))
        v_t.append(0.2 * jax.random.normal(ks[4 * b + 1], (C4, C4, 3, 3), jnp.float32))
        g_t.append(1.0 + 0.1 * jax.random.normal(ks[4 * b + 2], (C4,), jnp.float32))
        bias_t.append(0.1 * jax.random.normal(ks[4 * b + 3], (C4,), jnp.float32))
    w1_t = jnp.stack(w1_t)          # (4, C4, C)
    v_t = jnp.stack(v_t)            # (4, C4, C4, 3, 3)
    g_t = jnp.stack(g_t)            # (4, C4)
    bias_t = jnp.stack(bias_t)      # (4, C4)

    # weight norm (dim=0): w = g * v / ||v||_2 over (in, kh, kw)
    v_norm = jnp.sqrt(jnp.sum(v_t ** 2, axis=(2, 3, 4), keepdims=True))
    w2_t = g_t[:, :, None, None, None] * v_t / v_norm       # (4, C4, C4, 3, 3)
    return w1_t, w2_t, bias_t


def to_kernel_layout(w1_t, w2_t, bias_t):
    """Fuse the 4 branches into block matmul weights (bf16 MXU operands)."""
    nb, C4, C = w1_t.shape
    # 1x1: (4, C4, C) [out, in] -> concat branch outputs -> (C, C) [in, out]
    w1_k = jnp.concatenate([w1_t[b].T for b in range(nb)], axis=1)
    # 3x3: (4, C4o, C4i, 3, 3) -> block-diagonal (ky, kx, in, out)
    w2_full = jnp.zeros((3, 3, C, C), w2_t.dtype)
    for b in range(nb):
        blk = jnp.transpose(w2_t[b], (2, 3, 1, 0))           # (ky, kx, in, out)
        w2_full = w2_full.at[:, :, b * C4:(b + 1) * C4,
                             b * C4:(b + 1) * C4].set(blk)
    # Regroup per kx with the ky taps stacked along the output dim:
    #   w2_k[kx][:, ky*C:(ky+1)*C] == w2_full[ky, kx]
    w2_k = jnp.transpose(w2_full, (1, 2, 0, 3)).reshape(3, C, 3 * C)
    bias_k = bias_t.reshape(1, C)                             # (1, C), f32
    return w1_k.astype(jnp.bfloat16), w2_k.astype(jnp.bfloat16), bias_k


def ref_forward(x_nchw, w1_t, w2_t, bias_t):
    """Pure-JAX NCHW reference (mirrors the PyTorch forward), full f32."""
    outs = []
    for b in range(4):
        h = jax.lax.conv_general_dilated(
            x_nchw, w1_t[b][:, :, None, None], (1, 1), [(0, 0), (0, 0)],
            dimension_numbers=('NCHW', 'OIHW', 'NCHW'))
        h = jnp.maximum(h, 0.0)
        h = jax.lax.conv_general_dilated(
            h, w2_t[b], (1, 1), [(1, 1), (1, 1)],
            dimension_numbers=('NCHW', 'OIHW', 'NCHW'))
        h = h + bias_t[b][None, :, None, None]
        outs.append(jnp.maximum(h, 0.0))
    return jnp.concatenate(outs, axis=1) + x_nchw


if __name__ == "__main__":
    N, n_feat, H, W = 2, 32, 16, 16   # kernel_size = 3  ->  padding = 1

    key = jax.random.PRNGKey(0)
    kx, kp = jax.random.split(key)
    x = jax.random.normal(kx, (N, n_feat, H, W), jnp.float32)

    w1_t, w2_t, bias_t = init_params(kp, n_feat)
    w1_k, w2_k, bias_k = to_kernel_layout(w1_t, w2_t, bias_t)

    ref = ref_forward(x, w1_t, w2_t, bias_t)

    # tile_rows=8 exercises the multi-tile halo path (T=2); tile_rows=16 is the
    # degenerate single-tile-per-image case.
    for tr in (8, 16):
        out = base_branch_forward(x, w1_k, w2_k, bias_k, tile_rows=tr)
        out = jax.block_until_ready(out)
        # Tolerance covers the intentional bf16 MXU operands / bf16 input.
        np.testing.assert_allclose(np.asarray(out), np.asarray(ref),
                                   rtol=5e-2, atol=5e-2)
    print("KERNEL_OK")
</pallas_src>

<mosaic_0001>
module attributes {stable_mosaic.version = 11 : i64} {
  func.func @base_branch_kernel(%arg0: i32, %arg1: i32, %arg2: memref<1x1x264x32xbf16, #tpu.memory_space<vmem>>, %arg3: memref<32x32xbf16, #tpu.memory_space<vmem>>, %arg4: memref<3x32x96xbf16, #tpu.memory_space<vmem>>, %arg5: memref<1x32xf32, #tpu.memory_space<vmem>>, %arg6: memref<1x192x32xf32, #tpu.memory_space<vmem>>) attributes {dimension_semantics = [#tpu.dimension_semantics<parallel>, #tpu.dimension_semantics<parallel>], iteration_bounds = array<i64: 2, 2>, scalar_prefetch = 0 : i64, scratch_operands = 0 : i64, tpu.core_type = #tpu.core_type<tc>, window_params = [{transform_indices = @transform_0, window_bounds = array<i64: 1, 1, 264, 32>}, {pipeline_mode = #tpu.pipeline_mode<synchronous>, transform_indices = @transform_1, window_bounds = array<i64: 32, 32>}, {pipeline_mode = #tpu.pipeline_mode<synchronous>, transform_indices = @transform_2, window_bounds = array<i64: 3, 32, 96>}, {pipeline_mode = #tpu.pipeline_mode<synchronous>, transform_indices = @transform_3, window_bounds = array<i64: 1, 32>}, {transform_indices = @transform_4, window_bounds = array<i64: 1, 192, 32>}]} {
    %c0 = arith.constant 0 : index
    %c0_0 = arith.constant 0 : index
    %c0_1 = arith.constant 0 : index
    %c0_2 = arith.constant 0 : index
    %0 = vector.load %arg2[%c0, %c0_0, %c0_1, %c0_2] : memref<1x1x264x32xbf16, #tpu.memory_space<vmem>>, vector<1x1x264x32xbf16>
    %1 = vector.shape_cast %0 : vector<1x1x264x32xbf16> to vector<264x32xbf16>
    %c0_3 = arith.constant 0 : index
    %c0_4 = arith.constant 0 : index
    %2 = vector.load %arg3[%c0_3, %c0_4] : memref<32x32xbf16, #tpu.memory_space<vmem>>, vector<32x32xbf16>
    %cst = arith.constant dense<0.000000e+00> : vector<264x32xf32>
    %3 = tpu.matmul %1, %2, %cst {dimension_numbers = #tpu.dot_dimension_numbers<[1], [0], [0], [1], [0, 0, 1, 1], [], []>} : vector<264x32xbf16>, vector<32x32xbf16>, vector<264x32xf32> -> vector<264x32xf32>
    %cst_5 = arith.constant 0.000000e+00 : f32
    %4 = vector.broadcast %cst_5 : f32 to vector<264x32xf32>
    %5 = arith.maximumf %3, %4 : vector<264x32xf32>
    %6 = arith.truncf %5 : vector<264x32xf32> to vector<264x32xbf16>
    %7 = vector.extract_strided_slice %6 {offsets = [0, 0], sizes = [240, 32], strides = [1, 1]} : vector<264x32xbf16> to vector<240x32xbf16>
    %c0_6 = arith.constant 0 : index
    %c0_7 = arith.constant 0 : index
    %c0_8 = arith.constant 0 : index
    %8 = vector.load %arg4[%c0_6, %c0_7, %c0_8] : memref<3x32x96xbf16, #tpu.memory_space<vmem>>, vector<1x32x96xbf16>
    %9 = vector.shape_cast %8 : vector<1x32x96xbf16> to vector<32x96xbf16>
    %cst_9 = arith.constant dense<0.000000e+00> : vector<240x96xf32>
    %10 = tpu.matmul %7, %9, %cst_9 {dimension_numbers = #tpu.dot_dimension_numbers<[1], [0], [0], [1], [0, 0, 1, 1], [], []>} : vector<240x32xbf16>, vector<32x96xbf16>, vector<240x96xf32> -> vector<240x96xf32>
    %11 = vector.extract_strided_slice %10 {offsets = [0, 0], sizes = [192, 32], strides = [1, 1]} : vector<240x96xf32> to vector<192x32xf32>
    %12 = vector.extract_strided_slice %10 {offsets = [24, 32], sizes = [192, 32], strides = [1, 1]} : vector<240x96xf32> to vector<192x32xf32>
    %13 = arith.addf %11, %12 : vector<192x32xf32>
    %14 = vector.extract_strided_slice %10 {offsets = [48, 64], sizes = [192, 32], strides = [1, 1]} : vector<240x96xf32> to vector<192x32xf32>
    %15 = arith.addf %13, %14 : vector<192x32xf32>
    %16 = vector.extract_strided_slice %6 {offsets = [1, 0], sizes = [240, 32], strides = [1, 1]} : vector<264x32xbf16> to vector<240x32xbf16>
    %c1 = arith.constant 1 : index
    %c0_10 = arith.constant 0 : index
    %c0_11 = arith.constant 0 : index
    %17 = vector.load %arg4[%c1, %c0_10, %c0_11] : memref<3x32x96xbf16, #tpu.memory_space<vmem>>, vector<1x32x96xbf16>
    %18 = vector.shape_cast %17 : vector<1x32x96xbf16> to vector<32x96xbf16>
    %cst_12 = arith.constant dense<0.000000e+00> : vector<240x96xf32>
    %19 = tpu.matmul %16, %18, %cst_12 {dimension_numbers = #tpu.dot_dimension_numbers<[1], [0], [0], [1], [0, 0, 1, 1], [], []>} : vector<240x32xbf16>, vector<32x96xbf16>, vector<240x96xf32> -> vector<240x96xf32>
    %20 = vector.extract_strided_slice %19 {offsets = [0, 0], sizes = [192, 32], strides = [1, 1]} : vector<240x96xf32> to vector<192x32xf32>
    %21 = arith.addf %15, %20 : vector<192x32xf32>
    %22 = vector.extract_strided_slice %19 {offsets = [24, 32], sizes = [192, 32], strides = [1, 1]} : vector<240x96xf32> to vector<192x32xf32>
    %23 = arith.addf %21, %22 : vector<192x32xf32>
    %24 = vector.extract_strided_slice %19 {offsets = [48, 64], sizes = [192, 32], strides = [1, 1]} : vector<240x96xf32> to vector<192x32xf32>
    %25 = arith.addf %23, %24 : vector<192x32xf32>
    %26 = vector.extract_strided_slice %6 {offsets = [2, 0], sizes = [240, 32], strides = [1, 1]} : vector<264x32xbf16> to vector<240x32xbf16>
    %c2 = arith.constant 2 : index
    %c0_13 = arith.constant 0 : index
    %c0_14 = arith.constant 0 : index
    %27 = vector.load %arg4[%c2, %c0_13, %c0_14] : memref<3x32x96xbf16, #tpu.memory_space<vmem>>, vector<1x32x96xbf16>
    %28 = vector.shape_cast %27 : vector<1x32x96xbf16> to vector<32x96xbf16>
    %cst_15 = arith.constant dense<0.000000e+00> : vector<240x96xf32>
    %29 = tpu.matmul %26, %28, %cst_15 {dimension_numbers = #tpu.dot_dimension_numbers<[1], [0], [0], [1], [0, 0, 1, 1], [], []>} : vector<240x32xbf16>, vector<32x96xbf16>, vector<240x96xf32> -> vector<240x96xf32>
    %30 = vector.extract_strided_slice %29 {offsets = [0, 0], sizes = [192, 32], strides = [1, 1]} : vector<240x96xf32> to vector<192x32xf32>
    %31 = arith.addf %25, %30 : vector<192x32xf32>
    %32 = vector.extract_strided_slice %29 {offsets = [24, 32], sizes = [192, 32], strides = [1, 1]} : vector<240x96xf32> to vector<192x32xf32>
    %33 = arith.addf %31, %32 : vector<192x32xf32>
    %34 = vector.extract_strided_slice %29 {offsets = [48, 64], sizes = [192, 32], strides = [1, 1]} : vector<240x96xf32> to vector<192x32xf32>
    %35 = arith.addf %33, %34 : vector<192x32xf32>
    %c0_16 = arith.constant 0 : index
    %c0_17 = arith.constant 0 : index
    %36 = vector.load %arg5[%c0_16, %c0_17] : memref<1x32xf32, #tpu.memory_space<vmem>>, vector<1x32xf32>
    %37 = vector.broadcast %36 : vector<1x32xf32> to vector<192x32xf32>
    %38 = arith.addf %35, %37 : vector<192x32xf32>
    %cst_18 = arith.constant 0.000000e+00 : f32
    %39 = vector.broadcast %cst_18 : f32 to vector<192x32xf32>
    %40 = arith.maximumf %38, %39 : vector<192x32xf32>
    %41 = vector.extract_strided_slice %1 {offsets = [25, 0], sizes = [192, 32], strides = [1, 1]} : vector<264x32xbf16> to vector<192x32xbf16>
    %42 = arith.extf %41 : vector<192x32xbf16> to vector<192x32xf32>
    %43 = arith.addf %40, %42 : vector<192x32xf32>
    %c0_19 = arith.constant 0 : index
    %c0_20 = arith.constant 0 : index
    %c0_21 = arith.constant 0 : index
    %44 = vector.load %arg6[%c0_19, %c0_20, %c0_21] : memref<1x192x32xf32, #tpu.memory_space<vmem>>, vector<1x192x32xf32>
    %45 = vector.shape_cast %44 : vector<1x192x32xf32> to vector<192x32xf32>
    %46 = vector.shape_cast %43 : vector<192x32xf32> to vector<1x192x32xf32>
    tpu.vector_store %arg6[%c0_19, %c0_20, %c0_21], %46 {strides = array<i32>} : memref<1x192x32xf32, #tpu.memory_space<vmem>>, vector<1x192x32xf32>,
    return
  }
  func.func @transform_0(%arg0: i32, %arg1: i32) -> (i32, i32, i32, i32) {
    %c0_i32 = arith.constant 0 : i32
    %c0_i32_0 = arith.constant 0 : i32
    %c0_i32_1 = arith.constant 0 : i32
    return %arg0, %arg1, %c0_i32, %c0_i32_0 : i32, i32, i32, i32
  }
  func.func @transform_1(%arg0: i32, %arg1: i32) -> (i32, i32) {
    %c0_i32 = arith.constant 0 : i32
    %c0_i32_0 = arith.constant 0 : i32
    %c0_i32_1 = arith.constant 0 : i32
    return %c0_i32, %c0_i32_0 : i32, i32
  }
  func.func @transform_2(%arg0: i32, %arg1: i32) -> (i32, i32, i32) {
    %c0_i32 = arith.constant 0 : i32
    %c0_i32_0 = arith.constant 0 : i32
    %c0_i32_1 = arith.constant 0 : i32
    %c0_i32_2 = arith.constant 0 : i32
    return %c0_i32, %c0_i32_0, %c0_i32_1 : i32, i32, i32
  }
  func.func @transform_3(%arg0: i32, %arg1: i32) -> (i32, i32) {
    %c0_i32 = arith.constant 0 : i32
    %c0_i32_0 = arith.constant 0 : i32
    %c0_i32_1 = arith.constant 0 : i32
    return %c0_i32, %c0_i32_0 : i32, i32
  }
  func.func @transform_4(%arg0: i32, %arg1: i32) -> (i32, i32, i32) {
    %c0_i32 = arith.constant 0 : i32
    %c0_i32_0 = arith.constant 0 : i32
    return %arg0, %arg1, %c0_i32 : i32, i32, i32
  }
}

</mosaic_0001>

<llo_original>
// kernel: tpu_custom_call.1
$region0: #{tpu_custom_call.1}
  #allocation0 [shape = 'u32[]', space=smem, size = 0x4, offset = 0x4, fixed_abs, tag = 'smem constant byte address 0x4 - core index']
  #allocation1 [shape = 'u32[144,128]{1,0:T(1,128)}', space=vmem, size = 0x12000, scoped, tag = 'internal scratch']
  %s0 = inlined_call_operand.vmem [shape: bf16[2,2,264,32], index: 0, kind: input, shape index: {}]
  %s1 = inlined_call_operand.vmem [shape: bf16[32,32], index: 1, kind: input, shape index: {}]
  %s2 = inlined_call_operand.vmem [shape: bf16[3,32,96], index: 2, kind: input, shape index: {}]
  %s3 = inlined_call_operand.vmem [shape: f32[1,32], index: 3, kind: input, shape index: {}]
  %s4 = inlined_call_operand.vmem [shape: f32[2,384,32], index: 4, kind: output, shape index: {}]
  %s5 = sld [smem:[#allocation0]]
  $region49: #{tpu_custom_call.1} parent=0
    _
  %s7 = ssub.s32 1, %s5
  %s8 = scalar_select 0, %s7, %s5
  loop: start=0, step=1, limit=6
  $region2: #{tpu_custom_call.1} parent=0 // loop_pre_header
    _
  $region3: #{tpu_custom_call.1} parent=0 // loop_header
    %s10 = sphi 0, %s14
    %p11 = scmp.ge.s32.totalorder %s10, 6
    %s17 = sphi 0, %s29
    %s18 = sphi 0, %s25
    %s19 = sphi 0, %s17
    %s20 = sphi 0, %s18
    %s21 = sphi 0, %s19
    %s22 = sphi 0, %s20
    %s34 = sphi 0, %s36
    %s37 = sphi 0, %s34
    %s38 = sphi 0, %s37
    %s54 = sphi 0, %s38
    %s58 = sphi 0, %s58
    %s60 = sphi 0, %s58
    %s61 = sphi 0, %s60
    %s75 = sphi 0, %s61
    %s79 = sphi 0, %s79
    %s81 = sphi 0, %s79
    %s82 = sphi 0, %s81
    %s96 = sphi 0, %s82
    %s100 = sphi 0, %s100
    %s102 = sphi 0, %s100
    %s103 = sphi 0, %s102
    %s117 = sphi 0, %s103
    %s125 = sphi 0, %s127
    %s128 = sphi 0, %s125
    %s129 = sphi 0, %s128
    %s145 = sphi 0, %s129
  $region4: #{tpu_custom_call.1} parent=0 // loop_header_branch
    %13 = sbr.rel (%p11) target = $region8
  $region5: #{tpu_custom_call.1} parent=0 // loop_body
    %s15 = ssub.s32 %s10, 1
    %s16 = ssub.s32 %s10, 2
    %s23 = sadd.s32 1, %s18
    %p24 = scmp.ge.s32.totalorder %s23, 2
    %s25 = scalar_select %p24, 0, %s23
    %s26 = sadd.s32 1, %s17
    %s27 = scalar_select %p24, %s26, %s17
    %p28 = scmp.ge.s32.totalorder %s27, 2
    %s29 = scalar_select %p28, 0, %s27
    %s30 = ssub.s32 %s17, %s29
    %s31 = ssub.s32 %s18, %s25
    %s32 = sor.u32 %s30, %s31
    %p33 = scmp.eq.s32.totalorder %s32, 0
    %s35 = sadd.s32 %s34, 1
    %s36 = scalar_select %p33, %s34, %s35
    %p39 = pneg %p33
    %p40 = scmp.eq.s32.totalorder %s10, 3
    %p41 = por %p39, %p40
    %p42 = scmp.ne.s32.totalorder %s34, %s37
    %p43 = scmp.eq.s32.totalorder %s10, 0
    %p44 = por %p42, %p43
    %p45 = scmp.ne.s32.totalorder %s34, %s37
    %p46 = scmp.eq.s32.totalorder %s15, 3
    %p47 = por %p45, %p46
    %p48 = scmp.ne.s32.totalorder %s37, %s38
    %p49 = scmp.eq.s32.totalorder %s15, 0
    %p50 = por %p48, %p49
    %p51 = scmp.ne.s32.totalorder %s37, %s38
    %p52 = scmp.eq.s32.totalorder %s16, 3
    %p53 = por %p51, %p52
    %p55 = scmp.ne.s32.totalorder %s38, %s54
    %p56 = scmp.eq.s32.totalorder %s16, 0
    %p57 = por %p55, %p56
    %s59 = sadd.s32 %s58, 1
    %p62 = scmp.eq.s32.totalorder %s10, 3
    %p63 = scmp.ne.s32.totalorder %s58, %s60
    %p64 = scmp.eq.s32.totalorder %s10, 0
    %p65 = por %p63, %p64
    %p66 = scmp.ne.s32.totalorder %s58, %s60
    %p67 = scmp.eq.s32.totalorder %s15, 3
    %p68 = por %p66, %p67
    %p69 = scmp.ne.s32.totalorder %s60, %s61
    %p70 = scmp.eq.s32.totalorder %s15, 0
    %p71 = por %p69, %p70
    %p72 = scmp.ne.s32.totalorder %s60, %s61
    %p73 = scmp.eq.s32.totalorder %s16, 3
    %p74 = por %p72, %p73
    %p76 = scmp.ne.s32.totalorder %s61, %s75
    %p77 = scmp.eq.s32.totalorder %s16, 0
    %p78 = por %p76, %p77
    %s80 = sadd.s32 %s79, 1
    %p83 = scmp.eq.s32.totalorder %s10, 3
    %p84 = scmp.ne.s32.totalorder %s79, %s81
    %p85 = scmp.eq.s32.totalorder %s10, 0
    %p86 = por %p84, %p85
    %p87 = scmp.ne.s32.totalorder %s79, %s81
    %p88 = scmp.eq.s32.totalorder %s15, 3
    %p89 = por %p87, %p88
    %p90 = scmp.ne.s32.totalorder %s81, %s82
    %p91 = scmp.eq.s32.totalorder %s15, 0
    %p92 = por %p90, %p91
    %p93 = scmp.ne.s32.totalorder %s81, %s82
    %p94 = scmp.eq.s32.totalorder %s16, 3
    %p95 = por %p93, %p94
    %p97 = scmp.ne.s32.totalorder %s82, %s96
    %p98 = scmp.eq.s32.totalorder %s16, 0
    %p99 = por %p97, %p98
    %s101 = sadd.s32 %s100, 1
    %p104 = scmp.eq.s32.totalorder %s10, 3
    %p105 = scmp.ne.s32.totalorder %s100, %s102
    %p106 = scmp.eq.s32.totalorder %s10, 0
    %p107 = por %p105, %p106
    %p108 = scmp.ne.s32.totalorder %s100, %s102
    %p109 = scmp.eq.s32.totalorder %s15, 3
    %p110 = por %p108, %p109
    %p111 = scmp.ne.s32.totalorder %s102, %s103
    %p112 = scmp.eq.s32.totalorder %s15, 0
    %p113 = por %p111, %p112
    %p114 = scmp.ne.s32.totalorder %s102, %s103
    %p115 = scmp.eq.s32.totalorder %s16, 3
    %p116 = por %p114, %p115
    %p118 = scmp.ne.s32.totalorder %s103, %s117
    %p119 = scmp.eq.s32.totalorder %s16, 0
    %p120 = por %p118, %p119
    %s121 = ssub.s32 %s17, %s29
    %s122 = ssub.s32 %s18, %s25
    %s123 = sor.u32 %s121, %s122
    %p124 = scmp.eq.s32.totalorder %s123, 0
    %s126 = sadd.s32 %s125, 1
    %s127 = scalar_select %p124, %s125, %s126
    %p130 = pneg %p124
    %p131 = scmp.eq.s32.totalorder %s10, 3
    %p132 = por %p130, %p131
    %p133 = scmp.ne.s32.totalorder %s125, %s128
    %p134 = scmp.eq.s32.totalorder %s10, 0
    %p135 = por %p133, %p134
    %p136 = scmp.ne.s32.totalorder %s125, %s128
    %p137 = scmp.eq.s32.totalorder %s15, 3
    %p138 = por %p136, %p137
    %p139 = scmp.ne.s32.totalorder %s128, %s129
    %p140 = scmp.eq.s32.totalorder %s15, 0
    %p141 = por %p139, %p140
    %p142 = scmp.ne.s32.totalorder %s128, %s129
    %p143 = scmp.eq.s32.totalorder %s16, 3
    %p144 = por %p142, %p143
    %p146 = scmp.ne.s32.totalorder %s129, %s145
    %p147 = scmp.eq.s32.totalorder %s16, 0
    %p148 = por %p146, %p147
    %p149 = scmp.le.s32.totalorder 1, %s10
    %p150 = scmp.lt.s32.totalorder %s10, 5
    %p151 = pnand %p149, %p150
    %p152 = pneg %p151
    // Predicated region
    $region9: #{tpu_custom_call.1} parent=5 // pred_check
      _
    $region10: #{tpu_custom_call.1} parent=5 // pred_check_branch
      %154 = sbr.rel (%p151) target = $region12
    $region11: #{tpu_custom_call.1} parent=5 // pred_region
      %s155 = ssub.s32 %s10, 1
      // Predicated region
      $region13: #{tpu_custom_call.1} parent=11 // pred_check
        %p156 = pneg %p71
      $region14: #{tpu_custom_call.1} parent=11 // pred_check_branch
        %158 = sbr.rel (%p156) target = $region16
      $region15: #{tpu_custom_call.1} parent=11 // pred_region
        _
      $region16: #{tpu_custom_call.1} parent=11 // pred_fallthru
        _
      // Predicated region
      $region17: #{tpu_custom_call.1} parent=11 // pred_check
        %p159 = pneg %p92
      $region18: #{tpu_custom_call.1} parent=11 // pred_check_branch
        %161 = sbr.rel (%p159) target = $region20
      $region19: #{tpu_custom_call.1} parent=11 // pred_region
        _
      $region20: #{tpu_custom_call.1} parent=11 // pred_fallthru
        _
      // Predicated region
      $region21: #{tpu_custom_call.1} parent=11 // pred_check
        %p162 = pneg %p113
      $region22: #{tpu_custom_call.1} parent=11 // pred_check_branch
        %164 = sbr.rel (%p162) target = $region24
      $region23: #{tpu_custom_call.1} parent=11 // pred_region
        _
      $region24: #{tpu_custom_call.1} parent=11 // pred_fallthru
        _
    $region12: #{tpu_custom_call.1} parent=5 // pred_fallthru
      _
    %p165 = scmp.lt.s32.totalorder %s10, 4
    // Predicated region
    $region25: #{tpu_custom_call.1} parent=5 // pred_check
      %p166 = pneg %p165
    $region26: #{tpu_custom_call.1} parent=5 // pred_check_branch
      %168 = sbr.rel (%p166) target = $region28
    $region27: #{tpu_custom_call.1} parent=5 // pred_region
      // Predicated region
      $region29: #{tpu_custom_call.1} parent=27 // pred_check
        %p169 = pneg %p44
      $region30: #{tpu_custom_call.1} parent=27 // pred_check_branch
        %171 = sbr.rel (%p169) target = $region32
      $region31: #{tpu_custom_call.1} parent=27 // pred_region
        %p172 = scmp.lt.s32.totalorder %s17, 1
        %s173 = scalar_select %p172, %s17, 1
        %p174 = scmp.lt.s32.totalorder %s18, 1
        %s175 = scalar_select %p174, %s18, 1
        %s176 = smul.addr %s175, 33
        %s177 = smul.addr %s173, 66
        %s178 = sadd.s32 %s176, %s177
        %s179 = smul.addr %s178, 4
        %s180 = scalar_lea.vmem %s0, %s179
      $region32: #{tpu_custom_call.1} parent=27 // pred_fallthru
        _
    $region28: #{tpu_custom_call.1} parent=5 // pred_fallthru
      _
    %p181 = scmp.le.s32.totalorder 1, %s10
    %p182 = scmp.lt.s32.totalorder %s10, 5
    %p183 = pnand %p181, %p182
    %p184 = pneg %p183
    // Predicated region
    $region33: #{tpu_custom_call.1} parent=5 // pred_check
      _
    $region34: #{tpu_custom_call.1} parent=5 // pred_check_branch
      %186 = sbr.rel (%p183) target = $region36
    $region35: #{tpu_custom_call.1} parent=5 // pred_region
      %s187 = ssub.s32 %s10, 1
      %p188 = scmp.lt.s32.totalorder %s19, 1
      %s189 = scalar_select %p188, %s19, 1
      %p190 = scmp.lt.s32.totalorder %s20, 1
      %s191 = scalar_select %p190, %s20, 1
      %s192 = smul.addr %s191, 33
      %s193 = smul.addr %s189, 66
      %s194 = sadd.s32 %s192, %s193
      %s195 = smul.addr %s194, 4
      %s196 = scalar_lea.vmem %s0, %s195
      %p197 = pneg %p50
      %p198 = pneg %p47
      %p199 = pneg %p71
      %p200 = pneg %p68
      %p201 = pneg %p92
      %p202 = pneg %p89
      %p203 = pneg %p113
      %p204 = pneg %p110
      %p205 = pneg %p141
      %p206 = pneg %p138
      %s207 = smul.u32 24, %s20
      %p208 = scmp.lt.s32.totalorder %s19, 1
      %s209 = scalar_select %p208, %s19, 1
      %p210 = scmp.lt.s32.totalorder %s207, 47
      %s211 = scalar_select %p210, %s207, 47
      %s212 = smul.addr %s209, 48
      %s213 = sadd.s32 %s211, %s212
      %s214 = smul.addr %s213, 8
      %s215 = scalar_lea.vmem %s4, %s214
      %p216 = scmp.lt.s32.totalorder %s19, 1
      %s217 = scalar_select %p216, %s19, 1
      %p218 = scmp.lt.s32.totalorder %s20, 1
      %s219 = scalar_select %p218, %s20, 1
      %s220 = smul.addr %s219, 33
      %s221 = smul.addr %s217, 66
      %s222 = sadd.s32 %s220, %s221
      %s223 = smul.addr %s222, 4
      %s224 = scalar_lea.vmem %s0, %s223
      %s225 = smul.u32 24, %s20
      %p226 = scmp.lt.s32.totalorder %s19, 1
      %s227 = scalar_select %p226, %s19, 1
      %p228 = scmp.lt.s32.totalorder %s225, 47
      %s229 = scalar_select %p228, %s225, 47
      %s230 = smul.addr %s227, 48
      %s231 = sadd.s32 %s229, %s230
      %s232 = smul.addr %s231, 8
      %s233 = scalar_lea.vmem %s4, %s232
      %s234 = smul.u32 24, %s20
      %v236 = vld [vmem:[%s224] sm:$0xf]
      %v237 = vld [vmem:[%s224 + $0x4] sm:$0xf]
      %v238 = vld [vmem:[%s224 + $0x8] sm:$0xf]
      %v239 = vld [vmem:[%s224 + $0xc] sm:$0xf]
      %v240 = vld [vmem:[%s224 + $0x10] sm:$0xf]
      %v241 = vld [vmem:[%s224 + $0x14] sm:$0xf]
      %v242 = vld [vmem:[%s224 + $0x18] sm:$0xf]
      %v243 = vld [vmem:[%s224 + $0x1c] sm:$0xf]
      %v244 = vld [vmem:[%s224 + $0x20] sm:$0xf]
      %v245 = vld [vmem:[%s224 + $0x24] sm:$0xf]
      %v246 = vld [vmem:[%s224 + $0x28] sm:$0xf]
      %v247 = vld [vmem:[%s224 + $0x2c] sm:$0xf]
      %v248 = vld [vmem:[%s224 + $0x30] sm:$0xf]
      %v249 = vld [vmem:[%s224 + $0x34] sm:$0xf]
      %v250 = vld [vmem:[%s224 + $0x38] sm:$0xf]
      %v251 = vld [vmem:[%s224 + $0x3c] sm:$0xf]
      %v252 = vld [vmem:[%s224 + $0x40] sm:$0xf]
      %v253 = vld [vmem:[%s224 + $0x44] sm:$0xf]
      %v254 = vld [vmem:[%s224 + $0x48] sm:$0xf]
      %v255 = vld [vmem:[%s224 + $0x4c] sm:$0xf]
      %v256 = vld [vmem:[%s224 + $0x50] sm:$0xf]
      %v257 = vld [vmem:[%s224 + $0x54] sm:$0xf]
      %v258 = vld [vmem:[%s224 + $0x58] sm:$0xf]
      %v259 = vld [vmem:[%s224 + $0x5c] sm:$0xf]
      %v260 = vld [vmem:[%s224 + $0x60] sm:$0xf]
      %v261 = vld [vmem:[%s224 + $0x64] sm:$0xf]
      %v262 = vld [vmem:[%s224 + $0x68] sm:$0xf]
      %v263 = vld [vmem:[%s224 + $0x6c] sm:$0xf]
      %v264 = vld [vmem:[%s224 + $0x70] sm:$0xf]
      %v265 = vld [vmem:[%s224 + $0x74] sm:$0xf]
      %v266 = vld [vmem:[%s224 + $0x78] sm:$0xf]
      %v267 = vld [vmem:[%s224 + $0x7c] sm:$0xf]
      %v268 = vld [vmem:[%s224 + $0x80] sm:$0xf]
      %v269 = vld [vmem:[%s1] sm:$0xf]
      %v270 = vld [vmem:[%s1 + $0x4] sm:$0xf]
      %v271 = vld [vmem:[%s1 + $0x8] sm:$0xf]
      %v272 = vld [vmem:[%s1 + $0xc] sm:$0xf]
      %v306 = vunpack.c.l.b16 %v236
      %v307 = vunpack.c.l.b16 %v237
      %v308 = vunpack.c.l.b16 %v238
      %v309 = vunpack.c.l.b16 %v239
      %v310 = vunpack.c.l.b16 %v240
      %v311 = vunpack.c.l.b16 %v241
      %v312 = vunpack.c.l.b16 %v242
      %v313 = vunpack.c.l.b16 %v243
      %v314 = vunpack.c.l.b16 %v244
      %v315 = vunpack.c.l.b16 %v245
      %v316 = vunpack.c.l.b16 %v246
      %v317 = vunpack.c.l.b16 %v247
      %v318 = vunpack.c.l.b16 %v248
      %v319 = vunpack.c.l.b16 %v249
      %v320 = vunpack.c.l.b16 %v250
      %v321 = vunpack.c.l.b16 %v251
      %v322 = vunpack.c.l.b16 %v252
      %v323 = vunpack.c.l.b16 %v253
      %v324 = vunpack.c.l.b16 %v254
      %v325 = vunpack.c.l.b16 %v255
      %v326 = vunpack.c.l.b16 %v256
      %v327 = vunpack.c.l.b16 %v257
      %v328 = vunpack.c.l.b16 %v258
      %v329 = vunpack.c.l.b16 %v259
      %v330 = vunpack.c.l.b16 %v260
      %v331 = vunpack.c.l.b16 %v261
      %v332 = vunpack.c.l.b16 %v262
      %v333 = vunpack.c.l.b16 %v263
      %v334 = vunpack.c.l.b16 %v264
      %v335 = vunpack.c.l.b16 %v265
      %v336 = vunpack.c.l.b16 %v266
      %v337 = vunpack.c.l.b16 %v267
      %v338 = vunpack.c.l.b16 %v268
      %v339 = vpack.c.b16 %v307, %v306
      %v340 = vpack.c.b16 %v309, %v308
      %v341 = vpack.c.b16 %v311, %v310
      %v342 = vpack.c.b16 %v313, %v312
      %v343 = vpack.c.b16 %v315, %v314
      %v344 = vpack.c.b16 %v317, %v316
      %v345 = vpack.c.b16 %v319, %v318
      %v346 = vpack.c.b16 %v321, %v320
      %v347 = vpack.c.b16 %v323, %v322
      %v348 = vpack.c.b16 %v325, %v324
      %v349 = vpack.c.b16 %v327, %v326
      %v350 = vpack.c.b16 %v329, %v328
      %v351 = vpack.c.b16 %v331, %v330
      %v352 = vpack.c.b16 %v333, %v332
      %v353 = vpack.c.b16 %v335, %v334
      %v354 = vpack.c.b16 %v337, %v336
      %v355 = vpack.c.b16 %v338, %v338
      %v360 = vunpack.c.l.b16 %v269
      %v361 = vunpack.c.l.b16 %v270
      %v362 = vunpack.c.l.b16 %v271
      %v363 = vunpack.c.l.b16 %v272
      %v364 = vpack.c.b16 %v361, %v360
      %v365 = vpack.c.b16 %v363, %v362
      %vm368 = vcmask 261120
      %v370 = vsel %vm368, %v339, 0
      %v373 = vsel %vm368, %v340, 0
      %v376 = vsel %vm368, %v341, 0
      %v379 = vsel %vm368, %v342, 0
      %v382 = vsel %vm368, %v343, 0
      %v385 = vsel %vm368, %v344, 0
      %v388 = vsel %vm368, %v345, 0
      %v391 = vsel %vm368, %v346, 0
      %v394 = vsel %vm368, %v347, 0
      %v397 = vsel %vm368, %v348, 0
      %v400 = vsel %vm368, %v349, 0
      %v403 = vsel %vm368, %v350, 0
      %v406 = vsel %vm368, %v351, 0
      %v409 = vsel %vm368, %v352, 0
      %v412 = vsel %vm368, %v353, 0
      %v415 = vsel %vm368, %v354, 0
      %v418 = vsel %vm368, %v355, 0
      %420 = vmatprep.subr.bf16.mxu0 0
      %421 = vmatpush1.bf16.msra.mxu0 %v364
      %422 = vmatprep.subr.bf16.mxu0 0
      %423 = vmatpush1.bf16.msra.mxu0 %v365
      %424 = vmatprep.subr.bf16.mxu0 0
      %425 = vmatpush1.bf16.msra.mxu0 0
      %426 = vmatprep.subr.bf16.mxu0 0
      %427 = vmatpush1.bf16.msra.mxu0 0
      %428 = vmatprep.subr.bf16.mxu0 0
      %429 = vmatpush1.bf16.msra.mxu0 0
      %430 = vmatprep.subr.bf16.mxu0 0
      %431 = vmatpush1.bf16.msra.mxu0 0
      %432 = vmatprep.subr.bf16.mxu0 0
      %433 = vmatpush1.bf16.msra.mxu0 0
      %434 = vmatprep.subr.bf16.mxu0 0
      %435 = vmatpush1.bf16.msra.mxu0 0
      %436 = vmatprep.subr.bf16.mxu0 0
      %437 = vmatpush1.bf16.msra.mxu0 0
      %438 = vmatprep.subr.bf16.mxu0 0
      %439 = vmatpush1.bf16.msra.mxu0 0
      %440 = vmatprep.subr.bf16.mxu0 0
      %441 = vmatpush1.bf16.msra.mxu0 0
      %442 = vmatprep.subr.bf16.mxu0 0
      %443 = vmatpush1.bf16.msra.mxu0 0
      %444 = vmatprep.subr.bf16.mxu0 0
      %445 = vmatpush1.bf16.msra.mxu0 0
      %446 = vmatprep.subr.bf16.mxu0 0
      %447 = vmatpush1.bf16.msra.mxu0 0
      %448 = vmatprep.subr.bf16.mxu0 0
      %449 = vmatpush1.bf16.msra.mxu0 0
      %450 = vmatprep.subr.bf16.mxu0 0
      %451 = vmatpush1.bf16.msra.mxu0 0
      %452 = vmatprep.mubr.bf16.mxu0 0
      %453 = vmatmul.mubr.bf16.gmra.mrb[0].mxu0 %v370
      %v454 = vpop.f32.mrb[0].mxu0
      %v455 = vadd.f32 0.0, %v454
      %v456 = vpop.f32.mrb[0].mxu0
      %v457 = vpop.f32.mrb[0].mxu0
      %v458 = vadd.f32 0.0, %v457
      %v459 = vpop.f32.mrb[0].mxu0
      %460 = vmatprep.mubr.bf16.mxu0 0
      %461 = vmatmul.mubr.bf16.gmra.mrb[0].mxu0 %v373
      %v462 = vpop.f32.mrb[0].mxu0
      %v463 = vadd.f32 0.0, %v462
      %v464 = vpop.f32.mrb[0].mxu0
      %v465 = vpop.f32.mrb[0].mxu0
      %v466 = vadd.f32 0.0, %v465
      %v467 = vpop.f32.mrb[0].mxu0
      %468 = vmatprep.mubr.bf16.mxu0 0
      %469 = vmatmul.mubr.bf16.gmra.mrb[0].mxu0 %v376
      %v470 = vpop.f32.mrb[0].mxu0
      %v471 = vadd.f32 0.0, %v470
      %v472 = vpop.f32.mrb[0].mxu0
      %v473 = vpop.f32.mrb[0].mxu0
      %v474 = vadd.f32 0.0, %v473
      %v475 = vpop.f32.mrb[0].mxu0
      %476 = vmatprep.mubr.bf16.mxu0 0
      %477 = vmatmul.mubr.bf16.gmra.mrb[0].mxu0 %v379
      %v478 = vpop.f32.mrb[0].mxu0
      %v479 = vadd.f32 0.0, %v478
      %v480 = vpop.f32.mrb[0].mxu0
      %v481 = vpop.f32.mrb[0].mxu0
      %v482 = vadd.f32 0.0, %v481
      %v483 = vpop.f32.mrb[0].mxu0
      %484 = vmatprep.mubr.bf16.mxu0 0
      %485 = vmatmul.mubr.bf16.gmra.mrb[0].mxu0 %v382
      %v486 = vpop.f32.mrb[0].mxu0
      %v487 = vadd.f32 0.0, %v486
      %v488 = vpop.f32.mrb[0].mxu0
      %v489 = vpop.f32.mrb[0].mxu0
      %v490 = vadd.f32 0.0, %v489
      %v491 = vpop.f32.mrb[0].mxu0
      %492 = vmatprep.mubr.bf16.mxu0 0
      %493 = vmatmul.mubr.bf16.gmra.mrb[0].mxu0 %v385
      %v494 = vpop.f32.mrb[0].mxu0
      %v495 = vadd.f32 0.0, %v494
      %v496 = vpop.f32.mrb[0].mxu0
      %v497 = vpop.f32.mrb[0].mxu0
      %v498 = vadd.f32 0.0, %v497
      %v499 = vpop.f32.mrb[0].mxu0
      %500 = vmatprep.mubr.bf16.mxu0 0
      %501 = vmatmul.mubr.bf16.gmra.mrb[0].mxu0 %v388
      %v502 = vpop.f32.mrb[0].mxu0
      %v503 = vadd.f32 0.0, %v502
      %v504 = vpop.f32.mrb[0].mxu0
      %v505 = vpop.f32.mrb[0].mxu0
      %v506 = vadd.f32 0.0, %v505
      %v507 = vpop.f32.mrb[0].mxu0
      %508 = vmatprep.mubr.bf16.mxu0 0
      %509 = vmatmul.mubr.bf16.gmra.mrb[0].mxu0 %v391
      %v510 = vpop.f32.mrb[0].mxu0
      %v511 = vadd.f32 0.0, %v510
      %v512 = vpop.f32.mrb[0].mxu0
      %v513 = vpop.f32.mrb[0].mxu0
      %v514 = vadd.f32 0.0, %v513
      %v515 = vpop.f32.mrb[0].mxu0
      %516 = vmatprep.mubr.bf16.mxu0 0
      %517 = vmatmul.mubr.bf16.gmra.mrb[0].mxu0 %v394
      %v518 = vpop.f32.mrb[0].mxu0
      %v519 = vadd.f32 0.0, %v518
      %v520 = vpop.f32.mrb[0].mxu0
      %v521 = vpop.f32.mrb[0].mxu0
      %v522 = vadd.f32 0.0, %v521
      %v523 = vpop.f32.mrb[0].mxu0
      %524 = vmatprep.mubr.bf16.mxu0 0
      %525 = vmatmul.mubr.bf16.gmra.mrb[0].mxu0 %v397
      %v526 = vpop.f32.mrb[0].mxu0
      %v527 = vadd.f32 0.0, %v526
      %v528 = vpop.f32.mrb[0].mxu0
      %v529 = vpop.f32.mrb[0].mxu0
      %v530 = vadd.f32 0.0, %v529
      %v531 = vpop.f32.mrb[0].mxu0
      %532 = vmatprep.mubr.bf16.mxu0 0
      %533 = vmatmul.mubr.bf16.gmra.mrb[0].mxu0 %v400
      %v534 = vpop.f32.mrb[0].mxu0
      %v535 = vadd.f32 0.0, %v534
      %v536 = vpop.f32.mrb[0].mxu0
      %v537 = vpop.f32.mrb[0].mxu0
      %v538 = vadd.f32 0.0, %v537
      %v539 = vpop.f32.mrb[0].mxu0
      %540 = vmatprep.mubr.bf16.mxu0 0
      %541 = vmatmul.mubr.bf16.gmra.mrb[0].mxu0 %v403
      %v542 = vpop.f32.mrb[0].mxu0
      %v543 = vadd.f32 0.0, %v542
      %v544 = vpop.f32.mrb[0].mxu0
      %v545 = vpop.f32.mrb[0].mxu0
      %v546 = vadd.f32 0.0, %v545
      %v547 = vpop.f32.mrb[0].mxu0
      %548 = vmatprep.mubr.bf16.mxu0 0
      %549 = vmatmul.mubr.bf16.gmra.mrb[0].mxu0 %v406
      %v550 = vpop.f32.mrb[0].mxu0
      %v551 = vadd.f32 0.0, %v550
      %v552 = vpop.f32.mrb[0].mxu0
      %v553 = vpop.f32.mrb[0].mxu0
      %v554 = vadd.f32 0.0, %v553
      %v555 = vpop.f32.mrb[0].mxu0
      %556 = vmatprep.mubr.bf16.mxu0 0
      %557 = vmatmul.mubr.bf16.gmra.mrb[0].mxu0 %v409
      %v558 = vpop.f32.mrb[0].mxu0
      %v559 = vadd.f32 0.0, %v558
      %v560 = vpop.f32.mrb[0].mxu0
      %v561 = vpop.f32.mrb[0].mxu0
      %v562 = vadd.f32 0.0, %v561
      %v563 = vpop.f32.mrb[0].mxu0
      %564 = vmatprep.mubr.bf16.mxu0 0
      %565 = vmatmul.mubr.bf16.gmra.mrb[0].mxu0 %v412
      %v566 = vpop.f32.mrb[0].mxu0
      %v567 = vadd.f32 0.0, %v566
      %v568 = vpop.f32.mrb[0].mxu0
      %v569 = vpop.f32.mrb[0].mxu0
      %v570 = vadd.f32 0.0, %v569
      %v571 = vpop.f32.mrb[0].mxu0
      %572 = vmatprep.mubr.bf16.mxu0 0
      %573 = vmatmul.mubr.bf16.gmra.mrb[0].mxu0 %v415
      %v574 = vpop.f32.mrb[0].mxu0
      %v575 = vadd.f32 0.0, %v574
      %v576 = vpop.f32.mrb[0].mxu0
      %v577 = vpop.f32.mrb[0].mxu0
      %v578 = vadd.f32 0.0, %v577
      %v579 = vpop.f32.mrb[0].mxu0
      %580 = vmatprep.mubr.bf16.mxu0 0
      %581 = vmatmul.mubr.bf16.gmra.mrb[0].mxu0 %v418
      %v582 = vpop.f32.mrb[0].mxu0
      %v583 = vpop.f32.mrb[0].mxu0
      %v584 = vpop.f32.mrb[0].mxu0
      %v585 = vpop.f32.mrb[0].mxu0
      %586 = vdwg.mxu0
      %v587 = vmax.f32 %v455, 0.0
      %v588 = vmax.f32 %v458, 0.0
      %v589 = vmax.f32 %v463, 0.0
      %v590 = vmax.f32 %v466, 0.0
      %v591 = vmax.f32 %v471, 0.0
      %v592 = vmax.f32 %v474, 0.0
      %v593 = vmax.f32 %v479, 0.0
      %v594 = vmax.f32 %v482, 0.0
      %v595 = vmax.f32 %v487, 0.0
      %v596 = vmax.f32 %v490, 0.0
      %v597 = vmax.f32 %v495, 0.0
      %v598 = vmax.f32 %v498, 0.0
      %v599 = vmax.f32 %v503, 0.0
      %v600 = vmax.f32 %v506, 0.0
      %v601 = vmax.f32 %v511, 0.0
      %v602 = vmax.f32 %v514, 0.0
      %v603 = vmax.f32 %v519, 0.0
      %v604 = vmax.f32 %v522, 0.0
      %v605 = vmax.f32 %v527, 0.0
      %v606 = vmax.f32 %v530, 0.0
      %v607 = vmax.f32 %v535, 0.0
      %v608 = vmax.f32 %v538, 0.0
      %v609 = vmax.f32 %v543, 0.0
      %v610 = vmax.f32 %v546, 0.0
      %v611 = vmax.f32 %v551, 0.0
      %v612 = vmax.f32 %v554, 0.0
      %v613 = vmax.f32 %v559, 0.0
      %v614 = vmax.f32 %v562, 0.0
      %v615 = vmax.f32 %v567, 0.0
      %v616 = vmax.f32 %v570, 0.0
      %v617 = vmax.f32 %v575, 0.0
      %v618 = vmax.f32 %v578, 0.0
      %v619 = vpack.c.bf16 %v588, %v587
      %v620 = vpack.c.bf16 %v590, %v589
      %v621 = vpack.c.bf16 %v592, %v591
      %v622 = vpack.c.bf16 %v594, %v593
      %v623 = vpack.c.bf16 %v596, %v595
      %v624 = vpack.c.bf16 %v598, %v597
      %v625 = vpack.c.bf16 %v600, %v599
      %v626 = vpack.c.bf16 %v602, %v601
      %v627 = vpack.c.bf16 %v604, %v603
      %v628 = vpack.c.bf16 %v606, %v605
      %v629 = vpack.c.bf16 %v608, %v607
      %v630 = vpack.c.bf16 %v610, %v609
      %v631 = vpack.c.bf16 %v612, %v611
      %v632 = vpack.c.bf16 %v614, %v613
      %v633 = vpack.c.bf16 %v616, %v615
      %v634 = vpack.c.bf16 %v618, %v617
      %v635 = vld [vmem:[%s2] sm:$0xf]
      %v636 = vld [vmem:[%s2 + $0x4] sm:$0xf]
      %v637 = vld [vmem:[%s2 + $0x8] sm:$0xf]
      %v638 = vld [vmem:[%s2 + $0xc] sm:$0xf]
      %v643 = vunpack.c.l.b16 %v635
      %v644 = vunpack.c.l.b16 %v636
      %v645 = vunpack.c.l.b16 %v637
      %v646 = vunpack.c.l.b16 %v638
      %v647 = vpack.c.b16 %v644, %v643
      %v648 = vpack.c.b16 %v646, %v645
      %v652 = vsel %vm368, %v619, 0
      %v655 = vsel %vm368, %v620, 0
      %v658 = vsel %vm368, %v621, 0
      %v661 = vsel %vm368, %v622, 0
      %v664 = vsel %vm368, %v623, 0
      %v667 = vsel %vm368, %v624, 0
      %v670 = vsel %vm368, %v625, 0
      %v673 = vsel %vm368, %v626, 0
      %v676 = vsel %vm368, %v627, 0
      %v679 = vsel %vm368, %v628, 0
      %v682 = vsel %vm368, %v629, 0
      %v685 = vsel %vm368, %v630, 0
      %v688 = vsel %vm368, %v631, 0
      %v691 = vsel %vm368, %v632, 0
      %v694 = vsel %vm368, %v633, 0
      %696 = vmatprep.subr.bf16.mxu0 0
      %697 = vmatpush1.bf16.msra.mxu0 %v647
      %698 = vmatprep.subr.bf16.mxu0 0
      %699 = vmatpush1.bf16.msra.mxu0 %v648
      %700 = vmatprep.subr.bf16.mxu0 0
      %701 = vmatpush1.bf16.msra.mxu0 0
      %702 = vmatprep.subr.bf16.mxu0 0
      %703 = vmatpush1.bf16.msra.mxu0 0
      %704 = vmatprep.subr.bf16.mxu0 0
      %705 = vmatpush1.bf16.msra.mxu0 0
      %706 = vmatprep.subr.bf16.mxu0 0
      %707 = vmatpush1.bf16.msra.mxu0 0
      %708 = vmatprep.subr.bf16.mxu0 0
      %709 = vmatpush1.bf16.msra.mxu0 0
      %710 = vmatprep.subr.bf16.mxu0 0
      %711 = vmatpush1.bf16.msra.mxu0 0
      %712 = vmatprep.subr.bf16.mxu0 0
      %713 = vmatpush1.bf16.msra.mxu0 0
      %714 = vmatprep.subr.bf16.mxu0 0
      %715 = vmatpush1.bf16.msra.mxu0 0
      %716 = vmatprep.subr.bf16.mxu0 0
      %717 = vmatpush1.bf16.msra.mxu0 0
      %718 = vmatprep.subr.bf16.mxu0 0
      %719 = vmatpush1.bf16.msra.mxu0 0
      %720 = vmatprep.subr.bf16.mxu0 0
      %721 = vmatpush1.bf16.msra.mxu0 0
      %722 = vmatprep.subr.bf16.mxu0 0
      %723 = vmatpush1.bf16.msra.mxu0 0
      %724 = vmatprep.subr.bf16.mxu0 0
      %725 = vmatpush1.bf16.msra.mxu0 0
      %726 = vmatprep.subr.bf16.mxu0 0
      %727 = vmatpush1.bf16.msra.mxu0 0
      %728 = vmatprep.mubr.bf16.mxu0 0
      %729 = vmatmul.mubr.bf16.gmra.mrb[0].mxu0 %v652
      %v730 = vpop.f32.mrb[0].mxu0
      %v731 = vadd.f32 0.0, %v730
      %v732 = vpop.f32.mrb[0].mxu0
      %v733 = vpop.f32.mrb[0].mxu0
      %v734 = vadd.f32 0.0, %v733
      %v735 = vpop.f32.mrb[0].mxu0
      %736 = vmatprep.mubr.bf16.mxu0 0
      %737 = vmatmul.mubr.bf16.gmra.mrb[0].mxu0 %v655
      %v738 = vpop.f32.mrb[0].mxu0
      %v739 = vadd.f32 0.0, %v738
      %v740 = vpop.f32.mrb[0].mxu0
      %v741 = vpop.f32.mrb[0].mxu0
      %v742 = vadd.f32 0.0, %v741
      %v743 = vpop.f32.mrb[0].mxu0
      %744 = vmatprep.mubr.bf16.mxu0 0
      %745 = vmatmul.mubr.bf16.gmra.mrb[0].mxu0 %v658
      %v746 = vpop.f32.mrb[0].mxu0
      %v747 = vadd.f32 0.0, %v746
      %v748 = vpop.f32.mrb[0].mxu0
      %v749 = vpop.f32.mrb[0].mxu0
      %v750 = vadd.f32 0.0, %v749
      %v751 = vpop.f32.mrb[0].mxu0
      %752 = vmatprep.mubr.bf16.mxu0 0
      %753 = vmatmul.mubr.bf16.gmra.mrb[0].mxu0 %v661
      %v754 = vpop.f32.mrb[0].mxu0
      %v755 = vadd.f32 0.0, %v754
      %v756 = vpop.f32.mrb[0].mxu0
      %v757 = vpop.f32.mrb[0].mxu0
      %v758 = vadd.f32 0.0, %v757
      %v759 = vpop.f32.mrb[0].mxu0
      %760 = vmatprep.mubr.bf16.mxu0 0
      %761 = vmatmul.mubr.bf16.gmra.mrb[0].mxu0 %v664
      %v762 = vpop.f32.mrb[0].mxu0
      %v763 = vadd.f32 0.0, %v762
      %v764 = vpop.f32.mrb[0].mxu0
      %v765 = vpop.f32.mrb[0].mxu0
      %v766 = vadd.f32 0.0, %v765
      %v767 = vpop.f32.mrb[0].mxu0
      %768 = vmatprep.mubr.bf16.mxu0 0
      %769 = vmatmul.mubr.bf16.gmra.mrb[0].mxu0 %v667
      %v770 = vpop.f32.mrb[0].mxu0
      %v771 = vadd.f32 0.0, %v770
      %v772 = vpop.f32.mrb[0].mxu0
      %v773 = vpop.f32.mrb[0].mxu0
      %v774 = vadd.f32 0.0, %v773
      %v775 = vpop.f32.mrb[0].mxu0
      %776 = vmatprep.mubr.bf16.mxu0 0
      %777 = vmatmul.mubr.bf16.gmra.mrb[0].mxu0 %v670
      %v778 = vpop.f32.mrb[0].mxu0
      %v779 = vadd.f32 0.0, %v778
      %v780 = vpop.f32.mrb[0].mxu0
      %v781 = vpop.f32.mrb[0].mxu0
      %v782 = vadd.f32 0.0, %v781
      %v783 = vpop.f32.mrb[0].mxu0
      %784 = vmatprep.mubr.bf16.mxu0 0
      %785 = vmatmul.mubr.bf16.gmra.mrb[0].mxu0 %v673
      %v786 = vpop.f32.mrb[0].mxu0
      %v787 = vadd.f32 0.0, %v786
      %v788 = vpop.f32.mrb[0].mxu0
      %v789 = vpop.f32.mrb[0].mxu0
      %v790 = vadd.f32 0.0, %v789
      %v791 = vpop.f32.mrb[0].mxu0
      %792 = vmatprep.mubr.bf16.mxu0 0
      %793 = vmatmul.mubr.bf16.gmra.mrb[0].mxu0 %v676
      %v794 = vpop.f32.mrb[0].mxu0
      %v795 = vadd.f32 0.0, %v794
      %v796 = vpop.f32.mrb[0].mxu0
      %v797 = vpop.f32.mrb[0].mxu0
      %v798 = vadd.f32 0.0, %v797
      %v799 = vpop.f32.mrb[0].mxu0
      %800 = vmatprep.mubr.bf16.mxu0 0
      %801 = vmatmul.mubr.bf16.gmra.mrb[0].mxu0 %v679
      %v802 = vpop.f32.mrb[0].mxu0
      %v803 = vadd.f32 0.0, %v802
      %v804 = vpop.f32.mrb[0].mxu0
      %v805 = vpop.f32.mrb[0].mxu0
      %v806 = vadd.f32 0.0, %v805
      %v807 = vpop.f32.mrb[0].mxu0
      %808 = vmatprep.mubr.bf16.mxu0 0
      %809 = vmatmul.mubr.bf16.gmra.mrb[0].mxu0 %v682
      %v810 = vpop.f32.mrb[0].mxu0
      %v811 = vadd.f32 0.0, %v810
      %v812 = vpop.f32.mrb[0].mxu0
      %v813 = vpop.f32.mrb[0].mxu0
      %v814 = vadd.f32 0.0, %v813
      %v815 = vpop.f32.mrb[0].mxu0
      %816 = vmatprep.mubr.bf16.mxu0 0
      %817 = vmatmul.mubr.bf16.gmra.mrb[0].mxu0 %v685
      %v818 = vpop.f32.mrb[0].mxu0
      %v819 = vadd.f32 0.0, %v818
      %v820 = vpop.f32.mrb[0].mxu0
      %v821 = vpop.f32.mrb[0].mxu0
      %v822 = vadd.f32 0.0, %v821
      %v823 = vpop.f32.mrb[0].mxu0
      %824 = vmatprep.mubr.bf16.mxu0 0
      %825 = vmatmul.mubr.bf16.gmra.mrb[0].mxu0 %v688
      %v826 = vpop.f32.mrb[0].mxu0
      %v827 = vadd.f32 0.0, %v826
      %v828 = vpop.f32.mrb[0].mxu0
      %v829 = vpop.f32.mrb[0].mxu0
      %v830 = vadd.f32 0.0, %v829
      %v831 = vpop.f32.mrb[0].mxu0
      %832 = vmatprep.mubr.bf16.mxu0 0
      %833 = vmatmul.mubr.bf16.gmra.mrb[0].mxu0 %v691
      %v834 = vpop.f32.mrb[0].mxu0
      %v835 = vadd.f32 0.0, %v834
      %v836 = vpop.f32.mrb[0].mxu0
      %v837 = vpop.f32.mrb[0].mxu0
      %v838 = vadd.f32 0.0, %v837
      %v839 = vpop.f32.mrb[0].mxu0
      %840 = vmatprep.mubr.bf16.mxu0 0
      %841 = vmatmul.mubr.bf16.gmra.mrb[0].mxu0 %v694
      %v842 = vpop.f32.mrb[0].mxu0
      %v843 = vadd.f32 0.0, %v842
      %v844 = vpop.f32.mrb[0].mxu0
      %v845 = vpop.f32.mrb[0].mxu0
      %v846 = vadd.f32 0.0, %v845
      %v847 = vpop.f32.mrb[0].mxu0
      %848 = vdwg.mxu0
      %873 = vrot.lane.b32.xlu0 %v742, 96
      %v874 = vpop.permute.xlu0 %873
      %875 = vrot.lane.b32.xlu0 %v747, 96
      %v876 = vpop.permute.xlu0 %875
      %877 = vrot.lane.b32.xlu0 %v750, 96
      %v878 = vpop.permute.xlu0 %877
      %879 = vrot.lane.b32.xlu0 %v755, 96
      %v880 = vpop.permute.xlu0 %879
      %881 = vrot.lane.b32.xlu0 %v758, 96
      %v882 = vpop.permute.xlu0 %881
      %883 = vrot.lane.b32.xlu0 %v763, 96
      %v884 = vpop.permute.xlu0 %883
      %885 = vrot.lane.b32.xlu0 %v766, 96
      %v886 = vpop.permute.xlu0 %885
      %887 = vrot.lane.b32.xlu0 %v771, 96
      %v888 = vpop.permute.xlu0 %887
      %889 = vrot.lane.b32.xlu0 %v774, 96
      %v890 = vpop.permute.xlu0 %889
      %891 = vrot.lane.b32.xlu0 %v779, 96
      %v892 = vpop.permute.xlu0 %891
      %893 = vrot.lane.b32.xlu0 %v782, 96
      %v894 = vpop.permute.xlu0 %893
      %895 = vrot.lane.b32.xlu0 %v787, 96
      %v896 = vpop.permute.xlu0 %895
      %897 = vrot.lane.b32.xlu0 %v790, 96
      %v898 = vpop.permute.xlu0 %897
      %899 = vrot.lane.b32.xlu0 %v795, 96
      %v900 = vpop.permute.xlu0 %899
      %901 = vrot.lane.b32.xlu0 %v798, 96
      %v902 = vpop.permute.xlu0 %901
      %903 = vrot.lane.b32.xlu0 %v803, 96
      %v904 = vpop.permute.xlu0 %903
      %905 = vrot.lane.b32.xlu0 %v806, 96
      %v906 = vpop.permute.xlu0 %905
      %907 = vrot.lane.b32.xlu0 %v811, 96
      %v908 = vpop.permute.xlu0 %907
      %909 = vrot.lane.b32.xlu0 %v814, 96
      %v910 = vpop.permute.xlu0 %909
      %911 = vrot.lane.b32.xlu0 %v819, 96
      %v912 = vpop.permute.xlu0 %911
      %913 = vrot.lane.b32.xlu0 %v822, 96
      %v914 = vpop.permute.xlu0 %913
      %915 = vrot.lane.b32.xlu0 %v827, 96
      %v916 = vpop.permute.xlu0 %915
      %917 = vrot.lane.b32.xlu0 %v830, 96
      %v918 = vpop.permute.xlu0 %917
      %919 = vrot.lane.b32.xlu0 %v835, 96
      %v920 = vpop.permute.xlu0 %919
      %v945 = vadd.f32 %v731, %v874
      %v946 = vadd.f32 %v734, %v876
      %v947 = vadd.f32 %v739, %v878
      %v948 = vadd.f32 %v742, %v880
      %v949 = vadd.f32 %v747, %v882
      %v950 = vadd.f32 %v750, %v884
      %v951 = vadd.f32 %v755, %v886
      %v952 = vadd.f32 %v758, %v888
      %v953 = vadd.f32 %v763, %v890
      %v954 = vadd.f32 %v766, %v892
      %v955 = vadd.f32 %v771, %v894
      %v956 = vadd.f32 %v774, %v896
      %v957 = vadd.f32 %v779, %v898
      %v958 = vadd.f32 %v782, %v900
      %v959 = vadd.f32 %v787, %v902
      %v960 = vadd.f32 %v790, %v904
      %v961 = vadd.f32 %v795, %v906
      %v962 = vadd.f32 %v798, %v908
      %v963 = vadd.f32 %v803, %v910
      %v964 = vadd.f32 %v806, %v912
      %v965 = vadd.f32 %v811, %v914
      %v966 = vadd.f32 %v814, %v916
      %v967 = vadd.f32 %v819, %v918
      %v968 = vadd.f32 %v822, %v920
      %972 = vrot.lane.b32.xlu0 %v755, 64
      %v973 = vpop.permute.xlu0 %972
      %974 = vrot.lane.b32.xlu0 %v758, 64
      %v975 = vpop.permute.xlu0 %974
      %976 = vrot.lane.b32.xlu0 %v763, 64
      %v977 = vpop.permute.xlu0 %976
      %978 = vrot.lane.b32.xlu0 %v766, 64
      %v979 = vpop.permute.xlu0 %978
      %980 = vrot.lane.b32.xlu0 %v771, 64
      %v981 = vpop.permute.xlu0 %980
      %982 = vrot.lane.b32.xlu0 %v774, 64
      %v983 = vpop.permute.xlu0 %982
      %984 = vrot.lane.b32.xlu0 %v779, 64
      %v985 = vpop.permute.xlu0 %984
      %986 = vrot.lane.b32.xlu0 %v782, 64
      %v987 = vpop.permute.xlu0 %986
      %988 = vrot.lane.b32.xlu0 %v787, 64
      %v989 = vpop.permute.xlu0 %988
      %990 = vrot.lane.b32.xlu0 %v790, 64
      %v991 = vpop.permute.xlu0 %990
      %992 = vrot.lane.b32.xlu0 %v795, 64
      %v993 = vpop.permute.xlu0 %992
      %994 = vrot.lane.b32.xlu0 %v798, 64
      %v995 = vpop.permute.xlu0 %994
      %996 = vrot.lane.b32.xlu0 %v803, 64
      %v997 = vpop.permute.xlu0 %996
      %998 = vrot.lane.b32.xlu0 %v806, 64
      %v999 = vpop.permute.xlu0 %998
      %1000 = vrot.lane.b32.xlu0 %v811, 64
      %v1001 = vpop.permute.xlu0 %1000
      %1002 = vrot.lane.b32.xlu0 %v814, 64
      %v1003 = vpop.permute.xlu0 %1002
      %1004 = vrot.lane.b32.xlu0 %v819, 64
      %v1005 = vpop.permute.xlu0 %1004
      %1006 = vrot.lane.b32.xlu0 %v822, 64
      %v1007 = vpop.permute.xlu0 %1006
      %1008 = vrot.lane.b32.xlu0 %v827, 64
      %v1009 = vpop.permute.xlu0 %1008
      %1010 = vrot.lane.b32.xlu0 %v830, 64
      %v1011 = vpop.permute.xlu0 %1010
      %1012 = vrot.lane.b32.xlu0 %v835, 64
      %v1013 = vpop.permute.xlu0 %1012
      %1014 = vrot.lane.b32.xlu0 %v838, 64
      %v1015 = vpop.permute.xlu0 %1014
      %1016 = vrot.lane.b32.xlu0 %v843, 64
      %v1017 = vpop.permute.xlu0 %1016
      %1018 = vrot.lane.b32.xlu0 %v846, 64
      %v1019 = vpop.permute.xlu0 %1018
      %v1044 = vadd.f32 %v945, %v973
      %v1045 = vadd.f32 %v946, %v975
      %v1046 = vadd.f32 %v947, %v977
      %v1047 = vadd.f32 %v948, %v979
      %v1048 = vadd.f32 %v949, %v981
      %v1049 = vadd.f32 %v950, %v983
      %v1050 = vadd.f32 %v951, %v985
      %v1051 = vadd.f32 %v952, %v987
      %v1052 = vadd.f32 %v953, %v989
      %v1053 = vadd.f32 %v954, %v991
      %v1054 = vadd.f32 %v955, %v993
      %v1055 = vadd.f32 %v956, %v995
      %v1056 = vadd.f32 %v957, %v997
      %v1057 = vadd.f32 %v958, %v999
      %v1058 = vadd.f32 %v959, %v1001
      %v1059 = vadd.f32 %v960, %v1003
      %v1060 = vadd.f32 %v961, %v1005
      %v1061 = vadd.f32 %v962, %v1007
      %v1062 = vadd.f32 %v963, %v1009
      %v1063 = vadd.f32 %v964, %v1011
      %v1064 = vadd.f32 %v965, %v1013
      %v1065 = vadd.f32 %v966, %v1015
      %v1066 = vadd.f32 %v967, %v1017
      %v1067 = vadd.f32 %v968, %v1019
      %s1068 = scalar_lea.vmem %s2, 16
      %v1069 = vld [vmem:[%s1068] sm:$0xf]
      %v1070 = vld [vmem:[%s1068 + $0x4] sm:$0xf]
      %v1071 = vld [vmem:[%s1068 + $0x8] sm:$0xf]
      %v1072 = vld [vmem:[%s1068 + $0xc] sm:$0xf]
      %vm1073 = vsmask.f32 7424
      %v1074 = vshrl.u32 %v619, 16
      %v1076 = vshll.u32 %v619, 16
      %v1078 = vrot.slane %v1076, 1
      %v1079 = vor.u32 %v1074, %v1078
      %v1080 = vshll.u32 %v620, 16
      %v1082 = vrot.slane %v1080, 1
      %v1083 = vsel %vm1073, %v1079, %v1082
      %v1084 = vshrl.u32 %v620, 16
      %v1086 = vor.u32 %v1084, %v1082
      %v1087 = vshll.u32 %v621, 16
      %v1089 = vrot.slane %v1087, 1
      %v1090 = vsel %vm1073, %v1086, %v1089
      %v1091 = vshrl.u32 %v621, 16
      %v1093 = vor.u32 %v1091, %v1089
      %v1094 = vshll.u32 %v622, 16
      %v1096 = vrot.slane %v1094, 1
      %v1097 = vsel %vm1073, %v1093, %v1096
      %v1098 = vshrl.u32 %v622, 16
      %v1100 = vor.u32 %v1098, %v1096
      %v1101 = vshll.u32 %v623, 16
      %v1103 = vrot.slane %v1101, 1
      %v1104 = vsel %vm1073, %v1100, %v1103
      %v1105 = vshrl.u32 %v623, 16
      %v1107 = vor.u32 %v1105, %v1103
      %v1108 = vshll.u32 %v624, 16
      %v1110 = vrot.slane %v1108, 1
      %v1111 = vsel %vm1073, %v1107, %v1110
      %v1112 = vshrl.u32 %v624, 16
      %v1114 = vor.u32 %v1112, %v1110
      %v1115 = vshll.u32 %v625, 16
      %v1117 = vrot.slane %v1115, 1
      %v1118 = vsel %vm1073, %v1114, %v1117
      %v1119 = vshrl.u32 %v625, 16
      %v1121 = vor.u32 %v1119, %v1117
      %v1122 = vshll.u32 %v626, 16
      %v1124 = vrot.slane %v1122, 1
      %v1125 = vsel %vm1073, %v1121, %v1124
      %v1126 = vshrl.u32 %v626, 16
      %v1128 = vor.u32 %v1126, %v1124
      %v1129 = vshll.u32 %v627, 16
      %v1131 = vrot.slane %v1129, 1
      %v1132 = vsel %vm1073, %v1128, %v1131
      %v1133 = vshrl.u32 %v627, 16
      %v1135 = vor.u32 %v1133, %v1131
      %v1136 = vshll.u32 %v628, 16
      %v1138 = vrot.slane %v1136, 1
      %v1139 = vsel %vm1073, %v1135, %v1138
      %v1140 = vshrl.u32 %v628, 16
      %v1142 = vor.u32 %v1140, %v1138
      %v1143 = vshll.u32 %v629, 16
      %v1145 = vrot.slane %v1143, 1
      %v1146 = vsel %vm1073, %v1142, %v1145
      %v1147 = vshrl.u32 %v629, 16
      %v1149 = vor.u32 %v1147, %v1145
      %v1150 = vshll.u32 %v630, 16
      %v1152 = vrot.slane %v1150, 1
      %v1153 = vsel %vm1073, %v1149, %v1152
      %v1154 = vshrl.u32 %v630, 16
      %v1156 = vor.u32 %v1154, %v1152
      %v1157 = vshll.u32 %v631, 16
      %v1159 = vrot.slane %v1157, 1
      %v1160 = vsel %vm1073, %v1156, %v1159
      %v1161 = vshrl.u32 %v631, 16
      %v1163 = vor.u32 %v1161, %v1159
      %v1164 = vshll.u32 %v632, 16
      %v1166 = vrot.slane %v1164, 1
      %v1167 = vsel %vm1073, %v1163, %v1166
      %v1168 = vshrl.u32 %v632, 16
      %v1170 = vor.u32 %v1168, %v1166
      %v1171 = vshll.u32 %v633, 16
      %v1173 = vrot.slane %v1171, 1
      %v1174 = vsel %vm1073, %v1170, %v1173
      %v1175 = vshrl.u32 %v633, 16
      %v1177 = vor.u32 %v1175, %v1173
      %v1179 = vshll.u32 %v634, 16
      %v1181 = vrot.slane %v1179, 1
      %v1182 = vsel %vm1073, %v1177, %v1181
      %v1187 = vunpack.c.l.b16 %v1069
      %v1188 = vunpack.c.l.b16 %v1070
      %v1189 = vunpack.c.l.b16 %v1071
      %v1190 = vunpack.c.l.b16 %v1072
      %v1191 = vpack.c.b16 %v1188, %v1187
      %v1192 = vpack.c.b16 %v1190, %v1189
      %v1196 = vsel %vm368, %v1083, 0
      %v1199 = vsel %vm368, %v1090, 0
      %v1202 = vsel %vm368, %v1097, 0
      %v1205 = vsel %vm368, %v1104, 0
      %v1208 = vsel %vm368, %v1111, 0
      %v1211 = vsel %vm368, %v1118, 0
      %v1214 = vsel %vm368, %v1125, 0
      %v1217 = vsel %vm368, %v1132, 0
      %v1220 = vsel %vm368, %v1139, 0
      %v1223 = vsel %vm368, %v1146, 0
      %v1226 = vsel %vm368, %v1153, 0
      %v1229 = vsel %vm368, %v1160, 0
      %v1232 = vsel %vm368, %v1167, 0
      %v1235 = vsel %vm368, %v1174, 0
      %v1238 = vsel %vm368, %v1182, 0
      %1240 = vmatprep.subr.bf16.mxu0 0
      %1241 = vmatpush1.bf16.msra.mxu0 %v1191
      %1242 = vmatprep.subr.bf16.mxu0 0
      %1243 = vmatpush1.bf16.msra.mxu0 %v1192
      %1244 = vmatprep.subr.bf16.mxu0 0
      %1245 = vmatpush1.bf16.msra.mxu0 0
      %1246 = vmatprep.subr.bf16.mxu0 0
      %1247 = vmatpush1.bf16.msra.mxu0 0
      %1248 = vmatprep.subr.bf16.mxu0 0
      %1249 = vmatpush1.bf16.msra.mxu0 0
      %1250 = vmatprep.subr.bf16.mxu0 0
      %1251 = vmatpush1.bf16.msra.mxu0 0
      %1252 = vmatprep.subr.bf16.mxu0 0
      %1253 = vmatpush1.bf16.msra.mxu0 0
      %1254 = vmatprep.subr.bf16.mxu0 0
      %1255 = vmatpush1.bf16.msra.mxu0 0
      %1256 = vmatprep.subr.bf16.mxu0 0
      %1257 = vmatpush1.bf16.msra.mxu0 0
      %1258 = vmatprep.subr.bf16.mxu0 0
      %1259 = vmatpush1.bf16.msra.mxu0 0
      %1260 = vmatprep.subr.bf16.mxu0 0
      %1261 = vmatpush1.bf16.msra.mxu0 0
      %1262 = vmatprep.subr.bf16.mxu0 0
      %1263 = vmatpush1.bf16.msra.mxu0 0
      %1264 = vmatprep.subr.bf16.mxu0 0
      %1265 = vmatpush1.bf16.msra.mxu0 0
      %1266 = vmatprep.subr.bf16.mxu0 0
      %1267 = vmatpush1.bf16.msra.mxu0 0
      %1268 = vmatprep.subr.bf16.mxu0 0
      %1269 = vmatpush1.bf16.msra.mxu0 0
      %1270 = vmatprep.subr.bf16.mxu0 0
      %1271 = vmatpush1.bf16.msra.mxu0 0
      %1272 = vmatprep.mubr.bf16.mxu0 0
      %1273 = vmatmul.mubr.bf16.gmra.mrb[0].mxu0 %v1196
      %v1274 = vpop.f32.mrb[0].mxu0
      %v1275 = vadd.f32 0.0, %v1274
      %v1276 = vpop.f32.mrb[0].mxu0
      %v1277 = vpop.f32.mrb[0].mxu0
      %v1278 = vadd.f32 0.0, %v1277
      %v1279 = vpop.f32.mrb[0].mxu0
      %1280 = vmatprep.mubr.bf16.mxu0 0
      %1281 = vmatmul.mubr.bf16.gmra.mrb[0].mxu0 %v1199
      %v1282 = vpop.f32.mrb[0].mxu0
      %v1283 = vadd.f32 0.0, %v1282
      %v1284 = vpop.f32.mrb[0].mxu0
      %v1285 = vpop.f32.mrb[0].mxu0
      %v1286 = vadd.f32 0.0, %v1285
      %v1287 = vpop.f32.mrb[0].mxu0
      %1288 = vmatprep.mubr.bf16.mxu0 0
      %1289 = vmatmul.mubr.bf16.gmra.mrb[0].mxu0 %v1202
      %v1290 = vpop.f32.mrb[0].mxu0
      %v1291 = vadd.f32 0.0, %v1290
      %v1292 = vpop.f32.mrb[0].mxu0
      %v1293 = vpop.f32.mrb[0].mxu0
      %v1294 = vadd.f32 0.0, %v1293
      %v1295 = vpop.f32.mrb[0].mxu0
      %1296 = vmatprep.mubr.bf16.mxu0 0
      %1297 = vmatmul.mubr.bf16.gmra.mrb[0].mxu0 %v1205
      %v1298 = vpop.f32.mrb[0].mxu0
      %v1299 = vadd.f32 0.0, %v1298
      %v1300 = vpop.f32.mrb[0].mxu0
      %v1301 = vpop.f32.mrb[0].mxu0
      %v1302 = vadd.f32 0.0, %v1301
      %v1303 = vpop.f32.mrb[0].mxu0
      %1304 = vmatprep.mubr.bf16.mxu0 0
      %1305 = vmatmul.mubr.bf16.gmra.mrb[0].mxu0 %v1208
      %v1306 = vpop.f32.mrb[0].mxu0
      %v1307 = vadd.f32 0.0, %v1306
      %v1308 = vpop.f32.mrb[0].mxu0
      %v1309 = vpop.f32.mrb[0].mxu0
      %v1310 = vadd.f32 0.0, %v1309
      %v1311 = vpop.f32.mrb[0].mxu0
      %1312 = vmatprep.mubr.bf16.mxu0 0
      %1313 = vmatmul.mubr.bf16.gmra.mrb[0].mxu0 %v1211
      %v1314 = vpop.f32.mrb[0].mxu0
      %v1315 = vadd.f32 0.0, %v1314
      %v1316 = vpop.f32.mrb[0].mxu0
      %v1317 = vpop.f32.mrb[0].mxu0
      %v1318 = vadd.f32 0.0, %v1317
      %v1319 = vpop.f32.mrb[0].mxu0
      %1320 = vmatprep.mubr.bf16.mxu0 0
      %1321 = vmatmul.mubr.bf16.gmra.mrb[0].mxu0 %v1214
      %v1322 = vpop.f32.mrb[0].mxu0
      %v1323 = vadd.f32 0.0, %v1322
      %v1324 = vpop.f32.mrb[0].mxu0
      %v1325 = vpop.f32.mrb[0].mxu0
      %v1326 = vadd.f32 0.0, %v1325
      %v1327 = vpop.f32.mrb[0].mxu0
      %1328 = vmatprep.mubr.bf16.mxu0 0
      %1329 = vmatmul.mubr.bf16.gmra.mrb[0].mxu0 %v1217
      %v1330 = vpop.f32.mrb[0].mxu0
      %v1331 = vadd.f32 0.0, %v1330
      %v1332 = vpop.f32.mrb[0].mxu0
      %v1333 = vpop.f32.mrb[0].mxu0
      %v1334 = vadd.f32 0.0, %v1333
      %v1335 = vpop.f32.mrb[0].mxu0
      %1336 = vmatprep.mubr.bf16.mxu0 0
      %1337 = vmatmul.mubr.bf16.gmra.mrb[0].mxu0 %v1220
      %v1338 = vpop.f32.mrb[0].mxu0
      %v1339 = vadd.f32 0.0, %v1338
      %v1340 = vpop.f32.mrb[0].mxu0
      %v1341 = vpop.f32.mrb[0].mxu0
      %v1342 = vadd.f32 0.0, %v1341
      %v1343 = vpop.f32.mrb[0].mxu0
      %1344 = vmatprep.mubr.bf16.mxu0 0
      %1345 = vmatmul.mubr.bf16.gmra.mrb[0].mxu0 %v1223
      %v1346 = vpop.f32.mrb[0].mxu0
      %v1347 = vadd.f32 0.0, %v1346
      %v1348 = vpop.f32.mrb[0].mxu0
      %v1349 = vpop.f32.mrb[0].mxu0
      %v1350 = vadd.f32 0.0, %v1349
      %v1351 = vpop.f32.mrb[0].mxu0
      %1352 = vmatprep.mubr.bf16.mxu0 0
      %1353 = vmatmul.mubr.bf16.gmra.mrb[0].mxu0 %v1226
      %v1354 = vpop.f32.mrb[0].mxu0
      %v1355 = vadd.f32 0.0, %v1354
      %v1356 = vpop.f32.mrb[0].mxu0
      %v1357 = vpop.f32.mrb[0].mxu0
      %v1358 = vadd.f32 0.0, %v1357
      %v1359 = vpop.f32.mrb[0].mxu0
      %1360 = vmatprep.mubr.bf16.mxu0 0
      %1361 = vmatmul.mubr.bf16.gmra.mrb[0].mxu0 %v1229
      %v1362 = vpop.f32.mrb[0].mxu0
      %v1363 = vadd.f32 0.0, %v1362
      %v1364 = vpop.f32.mrb[0].mxu0
      %v1365 = vpop.f32.mrb[0].mxu0
      %v1366 = vadd.f32 0.0, %v1365
      %v1367 = vpop.f32.mrb[0].mxu0
      %1368 = vmatprep.mubr.bf16.mxu0 0
      %1369 = vmatmul.mubr.bf16.gmra.mrb[0].mxu0 %v1232
      %v1370 = vpop.f32.mrb[0].mxu0
      %v1371 = vadd.f32 0.0, %v1370
      %v1372 = vpop.f32.mrb[0].mxu0
      %v1373 = vpop.f32.mrb[0].mxu0
      %v1374 = vadd.f32 0.0, %v1373
      %v1375 = vpop.f32.mrb[0].mxu0
      %1376 = vmatprep.mubr.bf16.mxu0 0
      %1377 = vmatmul.mubr.bf16.gmra.mrb[0].mxu0 %v1235
      %v1378 = vpop.f32.mrb[0].mxu0
      %v1379 = vadd.f32 0.0, %v1378
      %v1380 = vpop.f32.mrb[0].mxu0
      %v1381 = vpop.f32.mrb[0].mxu0
      %v1382 = vadd.f32 0.0, %v1381
      %v1383 = vpop.f32.mrb[0].mxu0
      %1384 = vmatprep.mubr.bf16.mxu0 0
      %1385 = vmatmul.mubr.bf16.gmra.mrb[0].mxu0 %v1238
      %v1386 = vpop.f32.mrb[0].mxu0
      %v1387 = vadd.f32 0.0, %v1386
      %v1388 = vpop.f32.mrb[0].mxu0
      %v1389 = vpop.f32.mrb[0].mxu0
      %v1390 = vadd.f32 0.0, %v1389
      %v1391 = vpop.f32.mrb[0].mxu0
      %1392 = vdwg.mxu0
      %v1393 = vadd.f32 %v1044, %v1275
      %v1394 = vadd.f32 %v1045, %v1278
      %v1395 = vadd.f32 %v1046, %v1283
      %v1396 = vadd.f32 %v1047, %v1286
      %v1397 = vadd.f32 %v1048, %v1291
      %v1398 = vadd.f32 %v1049, %v1294
      %v1399 = vadd.f32 %v1050, %v1299
      %v1400 = vadd.f32 %v1051, %v1302
      %v1401 = vadd.f32 %v1052, %v1307
      %v1402 = vadd.f32 %v1053, %v1310
      %v1403 = vadd.f32 %v1054, %v1315
      %v1404 = vadd.f32 %v1055, %v1318
      %v1405 = vadd.f32 %v1056, %v1323
      %v1406 = vadd.f32 %v1057, %v1326
      %v1407 = vadd.f32 %v1058, %v1331
      %v1408 = vadd.f32 %v1059, %v1334
      %v1409 = vadd.f32 %v1060, %v1339
      %v1410 = vadd.f32 %v1061, %v1342
      %v1411 = vadd.f32 %v1062, %v1347
      %v1412 = vadd.f32 %v1063, %v1350
      %v1413 = vadd.f32 %v1064, %v1355
      %v1414 = vadd.f32 %v1065, %v1358
      %v1415 = vadd.f32 %v1066, %v1363
      %v1416 = vadd.f32 %v1067, %v1366
      %1441 = vrot.lane.b32.xlu0 %v1286, 96
      %v1442 = vpop.permute.xlu0 %1441
      %1443 = vrot.lane.b32.xlu0 %v1291, 96
      %v1444 = vpop.permute.xlu0 %1443
      %1445 = vrot.lane.b32.xlu0 %v1294, 96
      %v1446 = vpop.permute.xlu0 %1445
      %1447 = vrot.lane.b32.xlu0 %v1299, 96
      %v1448 = vpop.permute.xlu0 %1447
      %1449 = vrot.lane.b32.xlu0 %v1302, 96
      %v1450 = vpop.permute.xlu0 %1449
      %1451 = vrot.lane.b32.xlu0 %v1307, 96
      %v1452 = vpop.permute.xlu0 %1451
      %1453 = vrot.lane.b32.xlu0 %v1310, 96
      %v1454 = vpop.permute.xlu0 %1453
      %1455 = vrot.lane.b32.xlu0 %v1315, 96
      %v1456 = vpop.permute.xlu0 %1455
      %1457 = vrot.lane.b32.xlu0 %v1318, 96
      %v1458 = vpop.permute.xlu0 %1457
      %1459 = vrot.lane.b32.xlu0 %v1323, 96
      %v1460 = vpop.permute.xlu0 %1459
      %1461 = vrot.lane.b32.xlu0 %v1326, 96
      %v1462 = vpop.permute.xlu0 %1461
      %1463 = vrot.lane.b32.xlu0 %v1331, 96
      %v1464 = vpop.permute.xlu0 %1463
      %1465 = vrot.lane.b32.xlu0 %v1334, 96
      %v1466 = vpop.permute.xlu0 %1465
      %1467 = vrot.lane.b32.xlu0 %v1339, 96
      %v1468 = vpop.permute.xlu0 %1467
      %1469 = vrot.lane.b32.xlu0 %v1342, 96
      %v1470 = vpop.permute.xlu0 %1469
      %1471 = vrot.lane.b32.xlu0 %v1347, 96
      %v1472 = vpop.permute.xlu0 %1471
      %1473 = vrot.lane.b32.xlu0 %v1350, 96
      %v1474 = vpop.permute.xlu0 %1473
      %1475 = vrot.lane.b32.xlu0 %v1355, 96
      %v1476 = vpop.permute.xlu0 %1475
      %1477 = vrot.lane.b32.xlu0 %v1358, 96
      %v1478 = vpop.permute.xlu0 %1477
      %1479 = vrot.lane.b32.xlu0 %v1363, 96
      %v1480 = vpop.permute.xlu0 %1479
      %1481 = vrot.lane.b32.xlu0 %v1366, 96
      %v1482 = vpop.permute.xlu0 %1481
      %1483 = vrot.lane.b32.xlu0 %v1371, 96
      %v1484 = vpop.permute.xlu0 %1483
      %1485 = vrot.lane.b32.xlu0 %v1374, 96
      %v1486 = vpop.permute.xlu0 %1485
      %1487 = vrot.lane.b32.xlu0 %v1379, 96
      %v1488 = vpop.permute.xlu0 %1487
      %v1513 = vadd.f32 %v1393, %v1442
      %v1514 = vadd.f32 %v1394, %v1444
      %v1515 = vadd.f32 %v1395, %v1446
      %v1516 = vadd.f32 %v1396, %v1448
      %v1517 = vadd.f32 %v1397, %v1450
      %v1518 = vadd.f32 %v1398, %v1452
      %v1519 = vadd.f32 %v1399, %v1454
      %v1520 = vadd.f32 %v1400, %v1456
      %v1521 = vadd.f32 %v1401, %v1458
      %v1522 = vadd.f32 %v1402, %v1460
      %v1523 = vadd.f32 %v1403, %v1462
      %v1524 = vadd.f32 %v1404, %v1464
      %v1525 = vadd.f32 %v1405, %v1466
      %v1526 = vadd.f32 %v1406, %v1468
      %v1527 = vadd.f32 %v1407, %v1470
      %v1528 = vadd.f32 %v1408, %v1472
      %v1529 = vadd.f32 %v1409, %v1474
      %v1530 = vadd.f32 %v1410, %v1476
      %v1531 = vadd.f32 %v1411, %v1478
      %v1532 = vadd.f32 %v1412, %v1480
      %v1533 = vadd.f32 %v1413, %v1482
      %v1534 = vadd.f32 %v1414, %v1484
      %v1535 = vadd.f32 %v1415, %v1486
      %v1536 = vadd.f32 %v1416, %v1488
      %1540 = vrot.lane.b32.xlu0 %v1299, 64
      %v1541 = vpop.permute.xlu0 %1540
      %1542 = vrot.lane.b32.xlu0 %v1302, 64
      %v1543 = vpop.permute.xlu0 %1542
      %1544 = vrot.lane.b32.xlu0 %v1307, 64
      %v1545 = vpop.permute.xlu0 %1544
      %1546 = vrot.lane.b32.xlu0 %v1310, 64
      %v1547 = vpop.permute.xlu0 %1546
      %1548 = vrot.lane.b32.xlu0 %v1315, 64
      %v1549 = vpop.permute.xlu0 %1548
      %1550 = vrot.lane.b32.xlu0 %v1318, 64
      %v1551 = vpop.permute.xlu0 %1550
      %1552 = vrot.lane.b32.xlu0 %v1323, 64
      %v1553 = vpop.permute.xlu0 %1552
      %1554 = vrot.lane.b32.xlu0 %v1326, 64
      %v1555 = vpop.permute.xlu0 %1554
      %1556 = vrot.lane.b32.xlu0 %v1331, 64
      %v1557 = vpop.permute.xlu0 %1556
      %1558 = vrot.lane.b32.xlu0 %v1334, 64
      %v1559 = vpop.permute.xlu0 %1558
      %1560 = vrot.lane.b32.xlu0 %v1339, 64
      %v1561 = vpop.permute.xlu0 %1560
      %1562 = vrot.lane.b32.xlu0 %v1342, 64
      %v1563 = vpop.permute.xlu0 %1562
      %1564 = vrot.lane.b32.xlu0 %v1347, 64
      %v1565 = vpop.permute.xlu0 %1564
      %1566 = vrot.lane.b32.xlu0 %v1350, 64
      %v1567 = vpop.permute.xlu0 %1566
      %1568 = vrot.lane.b32.xlu0 %v1355, 64
      %v1569 = vpop.permute.xlu0 %1568
      %1570 = vrot.lane.b32.xlu0 %v1358, 64
      %v1571 = vpop.permute.xlu0 %1570
      %1572 = vrot.lane.b32.xlu0 %v1363, 64
      %v1573 = vpop.permute.xlu0 %1572
      %1574 = vrot.lane.b32.xlu0 %v1366, 64
      %v1575 = vpop.permute.xlu0 %1574
      %1576 = vrot.lane.b32.xlu0 %v1371, 64
      %v1577 = vpop.permute.xlu0 %1576
      %1578 = vrot.lane.b32.xlu0 %v1374, 64
      %v1579 = vpop.permute.xlu0 %1578
      %1580 = vrot.lane.b32.xlu0 %v1379, 64
      %v1581 = vpop.permute.xlu0 %1580
      %1582 = vrot.lane.b32.xlu0 %v1382, 64
      %v1583 = vpop.permute.xlu0 %1582
      %1584 = vrot.lane.b32.xlu0 %v1387, 64
      %v1585 = vpop.permute.xlu0 %1584
      %1586 = vrot.lane.b32.xlu0 %v1390, 64
      %v1587 = vpop.permute.xlu0 %1586
      %v1612 = vadd.f32 %v1513, %v1541
      %v1613 = vadd.f32 %v1514, %v1543
      %v1614 = vadd.f32 %v1515, %v1545
      %v1615 = vadd.f32 %v1516, %v1547
      %v1616 = vadd.f32 %v1517, %v1549
      %v1617 = vadd.f32 %v1518, %v1551
      %v1618 = vadd.f32 %v1519, %v1553
      %v1619 = vadd.f32 %v1520, %v1555
      %v1620 = vadd.f32 %v1521, %v1557
      %v1621 = vadd.f32 %v1522, %v1559
      %v1622 = vadd.f32 %v1523, %v1561
      %v1623 = vadd.f32 %v1524, %v1563
      %v1624 = vadd.f32 %v1525, %v1565
      %v1625 = vadd.f32 %v1526, %v1567
      %v1626 = vadd.f32 %v1527, %v1569
      %v1627 = vadd.f32 %v1528, %v1571
      %v1628 = vadd.f32 %v1529, %v1573
      %v1629 = vadd.f32 %v1530, %v1575
      %v1630 = vadd.f32 %v1531, %v1577
      %v1631 = vadd.f32 %v1532, %v1579
      %v1632 = vadd.f32 %v1533, %v1581
      %v1633 = vadd.f32 %v1534, %v1583
      %v1634 = vadd.f32 %v1535, %v1585
      %v1635 = vadd.f32 %v1536, %v1587
      %s1636 = scalar_lea.vmem %s2, 32
      %v1637 = vld [vmem:[%s1636] sm:$0xf]
      %v1638 = vld [vmem:[%s1636 + $0x4] sm:$0xf]
      %v1639 = vld [vmem:[%s1636 + $0x8] sm:$0xf]
      %v1640 = vld [vmem:[%s1636 + $0xc] sm:$0xf]
      %vm1657 = vcmask 1046528
      %v1658 = vrot.slane %v619, 1
      %v1659 = vrot.slane %v620, 1
      %v1660 = vsel %vm1657, %v1658, %v1659
      %v1661 = vrot.slane %v621, 1
      %v1662 = vsel %vm1657, %v1659, %v1661
      %v1663 = vrot.slane %v622, 1
      %v1664 = vsel %vm1657, %v1661, %v1663
      %v1665 = vrot.slane %v623, 1
      %v1666 = vsel %vm1657, %v1663, %v1665
      %v1667 = vrot.slane %v624, 1
      %v1668 = vsel %vm1657, %v1665, %v1667
      %v1669 = vrot.slane %v625, 1
      %v1670 = vsel %vm1657, %v1667, %v1669
      %v1671 = vrot.slane %v626, 1
      %v1672 = vsel %vm1657, %v1669, %v1671
      %v1673 = vrot.slane %v627, 1
      %v1674 = vsel %vm1657, %v1671, %v1673
      %v1675 = vrot.slane %v628, 1
      %v1676 = vsel %vm1657, %v1673, %v1675
      %v1677 = vrot.slane %v629, 1
      %v1678 = vsel %vm1657, %v1675, %v1677
      %v1679 = vrot.slane %v630, 1
      %v1680 = vsel %vm1657, %v1677, %v1679
      %v1681 = vrot.slane %v631, 1
      %v1682 = vsel %vm1657, %v1679, %v1681
      %v1683 = vrot.slane %v632, 1
      %v1684 = vsel %vm1657, %v1681, %v1683
      %v1685 = vrot.slane %v633, 1
      %v1686 = vsel %vm1657, %v1683, %v1685
      %v1687 = vrot.slane %v634, 1
      %v1688 = vsel %vm1657, %v1685, %v1687
      %v1693 = vunpack.c.l.b16 %v1637
      %v1694 = vunpack.c.l.b16 %v1638
      %v1695 = vunpack.c.l.b16 %v1639
      %v1696 = vunpack.c.l.b16 %v1640
      %v1697 = vpack.c.b16 %v1694, %v1693
      %v1698 = vpack.c.b16 %v1696, %v1695
      %v1702 = vsel %vm368, %v1660, 0
      %v1705 = vsel %vm368, %v1662, 0
      %v1708 = vsel %vm368, %v1664, 0
      %v1711 = vsel %vm368, %v1666, 0
      %v1714 = vsel %vm368, %v1668, 0
      %v1717 = vsel %vm368, %v1670, 0
      %v1720 = vsel %vm368, %v1672, 0
      %v1723 = vsel %vm368, %v1674, 0
      %v1726 = vsel %vm368, %v1676, 0
      %v1729 = vsel %vm368, %v1678, 0
      %v1732 = vsel %vm368, %v1680, 0
      %v1735 = vsel %vm368, %v1682, 0
      %v1738 = vsel %vm368, %v1684, 0
      %v1741 = vsel %vm368, %v1686, 0
      %v1744 = vsel %vm368, %v1688, 0
      %1746 = vmatprep.subr.bf16.mxu0 0
      %1747 = vmatpush1.bf16.msra.mxu0 %v1697
      %1748 = vmatprep.subr.bf16.mxu0 0
      %1749 = vmatpush1.bf16.msra.mxu0 %v1698
      %1750 = vmatprep.subr.bf16.mxu0 0
      %1751 = vmatpush1.bf16.msra.mxu0 0
      %1752 = vmatprep.subr.bf16.mxu0 0
      %1753 = vmatpush1.bf16.msra.mxu0 0
      %1754 = vmatprep.subr.bf16.mxu0 0
      %1755 = vmatpush1.bf16.msra.mxu0 0
      %1756 = vmatprep.subr.bf16.mxu0 0
      %1757 = vmatpush1.bf16.msra.mxu0 0
      %1758 = vmatprep.subr.bf16.mxu0 0
      %1759 = vmatpush1.bf16.msra.mxu0 0
      %1760 = vmatprep.subr.bf16.mxu0 0
      %1761 = vmatpush1.bf16.msra.mxu0 0
      %1762 = vmatprep.subr.bf16.mxu0 0
      %1763 = vmatpush1.bf16.msra.mxu0 0
      %1764 = vmatprep.subr.bf16.mxu0 0
      %1765 = vmatpush1.bf16.msra.mxu0 0
      %1766 = vmatprep.subr.bf16.mxu0 0
      %1767 = vmatpush1.bf16.msra.mxu0 0
      %1768 = vmatprep.subr.bf16.mxu0 0
      %1769 = vmatpush1.bf16.msra.mxu0 0
      %1770 = vmatprep.subr.bf16.mxu0 0
      %1771 = vmatpush1.bf16.msra.mxu0 0
      %1772 = vmatprep.subr.bf16.mxu0 0
      %1773 = vmatpush1.bf16.msra.mxu0 0
      %1774 = vmatprep.subr.bf16.mxu0 0
      %1775 = vmatpush1.bf16.msra.mxu0 0
      %1776 = vmatprep.subr.bf16.mxu0 0
      %1777 = vmatpush1.bf16.msra.mxu0 0
      %1778 = vmatprep.mubr.bf16.mxu0 0
      %1779 = vmatmul.mubr.bf16.gmra.mrb[0].mxu0 %v1702
      %v1780 = vpop.f32.mrb[0].mxu0
      %v1781 = vadd.f32 0.0, %v1780
      %v1782 = vpop.f32.mrb[0].mxu0
      %v1783 = vpop.f32.mrb[0].mxu0
      %v1784 = vadd.f32 0.0, %v1783
      %v1785 = vpop.f32.mrb[0].mxu0
      %1786 = vmatprep.mubr.bf16.mxu0 0
      %1787 = vmatmul.mubr.bf16.gmra.mrb[0].mxu0 %v1705
      %v1788 = vpop.f32.mrb[0].mxu0
      %v1789 = vadd.f32 0.0, %v1788
      %v1790 = vpop.f32.mrb[0].mxu0
      %v1791 = vpop.f32.mrb[0].mxu0
      %v1792 = vadd.f32 0.0, %v1791
      %v1793 = vpop.f32.mrb[0].mxu0
      %1794 = vmatprep.mubr.bf16.mxu0 0
      %1795 = vmatmul.mubr.bf16.gmra.mrb[0].mxu0 %v1708
      %v1796 = vpop.f32.mrb[0].mxu0
      %v1797 = vadd.f32 0.0, %v1796
      %v1798 = vpop.f32.mrb[0].mxu0
      %v1799 = vpop.f32.mrb[0].mxu0
      %v1800 = vadd.f32 0.0, %v1799
      %v1801 = vpop.f32.mrb[0].mxu0
      %1802 = vmatprep.mubr.bf16.mxu0 0
      %1803 = vmatmul.mubr.bf16.gmra.mrb[0].mxu0 %v1711
      %v1804 = vpop.f32.mrb[0].mxu0
      %v1805 = vadd.f32 0.0, %v1804
      %v1806 = vpop.f32.mrb[0].mxu0
      %v1807 = vpop.f32.mrb[0].mxu0
      %v1808 = vadd.f32 0.0, %v1807
      %v1809 = vpop.f32.mrb[0].mxu0
      %1810 = vmatprep.mubr.bf16.mxu0 0
      %1811 = vmatmul.mubr.bf16.gmra.mrb[0].mxu0 %v1714
      %v1812 = vpop.f32.mrb[0].mxu0
      %v1813 = vadd.f32 0.0, %v1812
      %v1814 = vpop.f32.mrb[0].mxu0
      %v1815 = vpop.f32.mrb[0].mxu0
      %v1816 = vadd.f32 0.0, %v1815
      %v1817 = vpop.f32.mrb[0].mxu0
      %1818 = vmatprep.mubr.bf16.mxu0 0
      %1819 = vmatmul.mubr.bf16.gmra.mrb[0].mxu0 %v1717
      %v1820 = vpop.f32.mrb[0].mxu0
      %v1821 = vadd.f32 0.0, %v1820
      %v1822 = vpop.f32.mrb[0].mxu0
      %v1823 = vpop.f32.mrb[0].mxu0
      %v1824 = vadd.f32 0.0, %v1823
      %v1825 = vpop.f32.mrb[0].mxu0
      %1826 = vmatprep.mubr.bf16.mxu0 0
      %1827 = vmatmul.mubr.bf16.gmra.mrb[0].mxu0 %v1720
      %v1828 = vpop.f32.mrb[0].mxu0
      %v1829 = vadd.f32 0.0, %v1828
      %v1830 = vpop.f32.mrb[0].mxu0
      %v1831 = vpop.f32.mrb[0].mxu0
      %v1832 = vadd.f32 0.0, %v1831
      %v1833 = vpop.f32.mrb[0].mxu0
      %1834 = vmatprep.mubr.bf16.mxu0 0
      %1835 = vmatmul.mubr.bf16.gmra.mrb[0].mxu0 %v1723
      %v1836 = vpop.f32.mrb[0].mxu0
      %v1837 = vadd.f32 0.0, %v1836
      %v1838 = vpop.f32.mrb[0].mxu0
      %v1839 = vpop.f32.mrb[0].mxu0
      %v1840 = vadd.f32 0.0, %v1839
      %v1841 = vpop.f32.mrb[0].mxu0
      %1842 = vmatprep.mubr.bf16.mxu0 0
      %1843 = vmatmul.mubr.bf16.gmra.mrb[0].mxu0 %v1726
      %v1844 = vpop.f32.mrb[0].mxu0
      %v1845 = vadd.f32 0.0, %v1844
      %v1846 = vpop.f32.mrb[0].mxu0
      %v1847 = vpop.f32.mrb[0].mxu0
      %v1848 = vadd.f32 0.0, %v1847
      %v1849 = vpop.f32.mrb[0].mxu0
      %1850 = vmatprep.mubr.bf16.mxu0 0
      %1851 = vmatmul.mubr.bf16.gmra.mrb[0].mxu0 %v1729
      %v1852 = vpop.f32.mrb[0].mxu0
      %v1853 = vadd.f32 0.0, %v1852
      %v1854 = vpop.f32.mrb[0].mxu0
      %v1855 = vpop.f32.mrb[0].mxu0
      %v1856 = vadd.f32 0.0, %v1855
      %v1857 = vpop.f32.mrb[0].mxu0
      %1858 = vmatprep.mubr.bf16.mxu0 0
      %1859 = vmatmul.mubr.bf16.gmra.mrb[0].mxu0 %v1732
      %v1860 = vpop.f32.mrb[0].mxu0
      %v1861 = vadd.f32 0.0, %v1860
      %v1862 = vpop.f32.mrb[0].mxu0
      %v1863 = vpop.f32.mrb[0].mxu0
      %v1864 = vadd.f32 0.0, %v1863
      %v1865 = vpop.f32.mrb[0].mxu0
      %1866 = vmatprep.mubr.bf16.mxu0 0
      %1867 = vmatmul.mubr.bf16.gmra.mrb[0].mxu0 %v1735
      %v1868 = vpop.f32.mrb[0].mxu0
      %v1869 = vadd.f32 0.0, %v1868
      %v1870 = vpop.f32.mrb[0].mxu0
      %v1871 = vpop.f32.mrb[0].mxu0
      %v1872 = vadd.f32 0.0, %v1871
      %v1873 = vpop.f32.mrb[0].mxu0
      %1874 = vmatprep.mubr.bf16.mxu0 0
      %1875 = vmatmul.mubr.bf16.gmra.mrb[0].mxu0 %v1738
      %v1876 = vpop.f32.mrb[0].mxu0
      %v1877 = vadd.f32 0.0, %v1876
      %v1878 = vpop.f32.mrb[0].mxu0
      %v1879 = vpop.f32.mrb[0].mxu0
      %v1880 = vadd.f32 0.0, %v1879
      %v1881 = vpop.f32.mrb[0].mxu0
      %1882 = vmatprep.mubr.bf16.mxu0 0
      %1883 = vmatmul.mubr.bf16.gmra.mrb[0].mxu0 %v1741
      %v1884 = vpop.f32.mrb[0].mxu0
      %v1885 = vadd.f32 0.0, %v1884
      %v1886 = vpop.f32.mrb[0].mxu0
      %v1887 = vpop.f32.mrb[0].mxu0
      %v1888 = vadd.f32 0.0, %v1887
      %v1889 = vpop.f32.mrb[0].mxu0
      %1890 = vmatprep.mubr.bf16.mxu0 0
      %1891 = vmatmul.mubr.bf16.gmra.mrb[0].mxu0 %v1744
      %v1892 = vpop.f32.mrb[0].mxu0
      %v1893 = vadd.f32 0.0, %v1892
      %v1894 = vpop.f32.mrb[0].mxu0
      %v1895 = vpop.f32.mrb[0].mxu0
      %v1896 = vadd.f32 0.0, %v1895
      %v1897 = vpop.f32.mrb[0].mxu0
      %1898 = vdwg.mxu0
      %v1899 = vadd.f32 %v1612, %v1781
      %v1900 = vadd.f32 %v1613, %v1784
      %v1901 = vadd.f32 %v1614, %v1789
      %v1902 = vadd.f32 %v1615, %v1792
      %v1903 = vadd.f32 %v1616, %v1797
      %v1904 = vadd.f32 %v1617, %v1800
      %v1905 = vadd.f32 %v1618, %v1805
      %v1906 = vadd.f32 %v1619, %v1808
      %v1907 = vadd.f32 %v1620, %v1813
      %v1908 = vadd.f32 %v1621, %v1816
      %v1909 = vadd.f32 %v1622, %v1821
      %v1910 = vadd.f32 %v1623, %v1824
      %v1911 = vadd.f32 %v1624, %v1829
      %v1912 = vadd.f32 %v1625, %v1832
      %v1913 = vadd.f32 %v1626, %v1837
      %v1914 = vadd.f32 %v1627, %v1840
      %v1915 = vadd.f32 %v1628, %v1845
      %v1916 = vadd.f32 %v1629, %v1848
      %v1917 = vadd.f32 %v1630, %v1853
      %v1918 = vadd.f32 %v1631, %v1856
      %v1919 = vadd.f32 %v1632, %v1861
      %v1920 = vadd.f32 %v1633, %v1864
      %v1921 = vadd.f32 %v1634, %v1869
      %v1922 = vadd.f32 %v1635, %v1872
      %1947 = vrot.lane.b32.xlu0 %v1792, 96
      %v1948 = vpop.permute.xlu0 %1947
      %1949 = vrot.lane.b32.xlu0 %v1797, 96
      %v1950 = vpop.permute.xlu0 %1949
      %1951 = vrot.lane.b32.xlu0 %v1800, 96
      %v1952 = vpop.permute.xlu0 %1951
      %1953 = vrot.lane.b32.xlu0 %v1805, 96
      %v1954 = vpop.permute.xlu0 %1953
      %1955 = vrot.lane.b32.xlu0 %v1808, 96
      %v1956 = vpop.permute.xlu0 %1955
      %1957 = vrot.lane.b32.xlu0 %v1813, 96
      %v1958 = vpop.permute.xlu0 %1957
      %1959 = vrot.lane.b32.xlu0 %v1816, 96
      %v1960 = vpop.permute.xlu0 %1959
      %1961 = vrot.lane.b32.xlu0 %v1821, 96
      %v1962 = vpop.permute.xlu0 %1961
      %1963 = vrot.lane.b32.xlu0 %v1824, 96
      %v1964 = vpop.permute.xlu0 %1963
      %1965 = vrot.lane.b32.xlu0 %v1829, 96
      %v1966 = vpop.permute.xlu0 %1965
      %1967 = vrot.lane.b32.xlu0 %v1832, 96
      %v1968 = vpop.permute.xlu0 %1967
      %1969 = vrot.lane.b32.xlu0 %v1837, 96
      %v1970 = vpop.permute.xlu0 %1969
      %1971 = vrot.lane.b32.xlu0 %v1840, 96
      %v1972 = vpop.permute.xlu0 %1971
      %1973 = vrot.lane.b32.xlu0 %v1845, 96
      %v1974 = vpop.permute.xlu0 %1973
      %1975 = vrot.lane.b32.xlu0 %v1848, 96
      %v1976 = vpop.permute.xlu0 %1975
      %1977 = vrot.lane.b32.xlu0 %v1853, 96
      %v1978 = vpop.permute.xlu0 %1977
      %1979 = vrot.lane.b32.xlu0 %v1856, 96
      %v1980 = vpop.permute.xlu0 %1979
      %1981 = vrot.lane.b32.xlu0 %v1861, 96
      %v1982 = vpop.permute.xlu0 %1981
      %1983 = vrot.lane.b32.xlu0 %v1864, 96
      %v1984 = vpop.permute.xlu0 %1983
      %1985 = vrot.lane.b32.xlu0 %v1869, 96
      %v1986 = vpop.permute.xlu0 %1985
      %1987 = vrot.lane.b32.xlu0 %v1872, 96
      %v1988 = vpop.permute.xlu0 %1987
      %1989 = vrot.lane.b32.xlu0 %v1877, 96
      %v1990 = vpop.permute.xlu0 %1989
      %1991 = vrot.lane.b32.xlu0 %v1880, 96
      %v1992 = vpop.permute.xlu0 %1991
      %1993 = vrot.lane.b32.xlu0 %v1885, 96
      %v1994 = vpop.permute.xlu0 %1993
      %v2019 = vadd.f32 %v1899, %v1948
      %v2020 = vadd.f32 %v1900, %v1950
      %v2021 = vadd.f32 %v1901, %v1952
      %v2022 = vadd.f32 %v1902, %v1954
      %v2023 = vadd.f32 %v1903, %v1956
      %v2024 = vadd.f32 %v1904, %v1958
      %v2025 = vadd.f32 %v1905, %v1960
      %v2026 = vadd.f32 %v1906, %v1962
      %v2027 = vadd.f32 %v1907, %v1964
      %v2028 = vadd.f32 %v1908, %v1966
      %v2029 = vadd.f32 %v1909, %v1968
      %v2030 = vadd.f32 %v1910, %v1970
      %v2031 = vadd.f32 %v1911, %v1972
      %v2032 = vadd.f32 %v1912, %v1974
      %v2033 = vadd.f32 %v1913, %v1976
      %v2034 = vadd.f32 %v1914, %v1978
      %v2035 = vadd.f32 %v1915, %v1980
      %v2036 = vadd.f32 %v1916, %v1982
      %v2037 = vadd.f32 %v1917, %v1984
      %v2038 = vadd.f32 %v1918, %v1986
      %v2039 = vadd.f32 %v1919, %v1988
      %v2040 = vadd.f32 %v1920, %v1990
      %v2041 = vadd.f32 %v1921, %v1992
      %v2042 = vadd.f32 %v1922, %v1994
      %2046 = vrot.lane.b32.xlu0 %v1805, 64
      %v2047 = vpop.permute.xlu0 %2046
      %2048 = vrot.lane.b32.xlu0 %v1808, 64
      %v2049 = vpop.permute.xlu0 %2048
      %2050 = vrot.lane.b32.xlu0 %v1813, 64
      %v2051 = vpop.permute.xlu0 %2050
      %2052 = vrot.lane.b32.xlu0 %v1816, 64
      %v2053 = vpop.permute.xlu0 %2052
      %2054 = vrot.lane.b32.xlu0 %v1821, 64
      %v2055 = vpop.permute.xlu0 %2054
      %2056 = vrot.lane.b32.xlu0 %v1824, 64
      %v2057 = vpop.permute.xlu0 %2056
      %2058 = vrot.lane.b32.xlu0 %v1829, 64
      %v2059 = vpop.permute.xlu0 %2058
      %2060 = vrot.lane.b32.xlu0 %v1832, 64
      %v2061 = vpop.permute.xlu0 %2060
      %2062 = vrot.lane.b32.xlu0 %v1837, 64
      %v2063 = vpop.permute.xlu0 %2062
      %2064 = vrot.lane.b32.xlu0 %v1840, 64
      %v2065 = vpop.permute.xlu0 %2064
      %2066 = vrot.lane.b32.xlu0 %v1845, 64
      %v2067 = vpop.permute.xlu0 %2066
      %2068 = vrot.lane.b32.xlu0 %v1848, 64
      %v2069 = vpop.permute.xlu0 %2068
      %2070 = vrot.lane.b32.xlu0 %v1853, 64
      %v2071 = vpop.permute.xlu0 %2070
      %2072 = vrot.lane.b32.xlu0 %v1856, 64
      %v2073 = vpop.permute.xlu0 %2072
      %2074 = vrot.lane.b32.xlu0 %v1861, 64
      %v2075 = vpop.permute.xlu0 %2074
      %2076 = vrot.lane.b32.xlu0 %v1864, 64
      %v2077 = vpop.permute.xlu0 %2076
      %2078 = vrot.lane.b32.xlu0 %v1869, 64
      %v2079 = vpop.permute.xlu0 %2078
      %2080 = vrot.lane.b32.xlu0 %v1872, 64
      %v2081 = vpop.permute.xlu0 %2080
      %2082 = vrot.lane.b32.xlu0 %v1877, 64
      %v2083 = vpop.permute.xlu0 %2082
      %2084 = vrot.lane.b32.xlu0 %v1880, 64
      %v2085 = vpop.permute.xlu0 %2084
      %2086 = vrot.lane.b32.xlu0 %v1885, 64
      %v2087 = vpop.permute.xlu0 %2086
      %2088 = vrot.lane.b32.xlu0 %v1888, 64
      %v2089 = vpop.permute.xlu0 %2088
      %2090 = vrot.lane.b32.xlu0 %v1893, 64
      %v2091 = vpop.permute.xlu0 %2090
      %2092 = vrot.lane.b32.xlu0 %v1896, 64
      %v2093 = vpop.permute.xlu0 %2092
      %v2118 = vadd.f32 %v2019, %v2047
      %v2119 = vadd.f32 %v2020, %v2049
      %v2120 = vadd.f32 %v2021, %v2051
      %v2121 = vadd.f32 %v2022, %v2053
      %v2122 = vadd.f32 %v2023, %v2055
      %v2123 = vadd.f32 %v2024, %v2057
      %v2124 = vadd.f32 %v2025, %v2059
      %v2125 = vadd.f32 %v2026, %v2061
      %v2126 = vadd.f32 %v2027, %v2063
      %v2127 = vadd.f32 %v2028, %v2065
      %v2128 = vadd.f32 %v2029, %v2067
      %v2129 = vadd.f32 %v2030, %v2069
      %v2130 = vadd.f32 %v2031, %v2071
      %v2131 = vadd.f32 %v2032, %v2073
      %v2132 = vadd.f32 %v2033, %v2075
      %v2133 = vadd.f32 %v2034, %v2077
      %v2134 = vadd.f32 %v2035, %v2079
      %v2135 = vadd.f32 %v2036, %v2081
      %v2136 = vadd.f32 %v2037, %v2083
      %v2137 = vadd.f32 %v2038, %v2085
      %v2138 = vadd.f32 %v2039, %v2087
      %v2139 = vadd.f32 %v2040, %v2089
      %v2140 = vadd.f32 %v2041, %v2091
      %v2141 = vadd.f32 %v2042, %v2093
      %v2142 = vld [vmem:[%s3] sm:$0x1]
      %v2144 = vlaneseq
      %v2145 = vshrl.u32 %v2144, 7
      %v2146 = vsub.s32 0, %v2145
      %v2147 = vrot.slane %v2142, %v2146
      %v2149 = vadd.f32 %v2118, %v2147
      %v2150 = vadd.f32 %v2119, %v2147
      %v2151 = vadd.f32 %v2120, %v2147
      %v2152 = vadd.f32 %v2121, %v2147
      %v2153 = vadd.f32 %v2122, %v2147
      %v2154 = vadd.f32 %v2123, %v2147
      %v2155 = vadd.f32 %v2124, %v2147
      %v2156 = vadd.f32 %v2125, %v2147
      %v2157 = vadd.f32 %v2126, %v2147
      %v2158 = vadd.f32 %v2127, %v2147
      %v2159 = vadd.f32 %v2128, %v2147
      %v2160 = vadd.f32 %v2129, %v2147
      %v2161 = vadd.f32 %v2130, %v2147
      %v2162 = vadd.f32 %v2131, %v2147
      %v2163 = vadd.f32 %v2132, %v2147
      %v2164 = vadd.f32 %v2133, %v2147
      %v2165 = vadd.f32 %v2134, %v2147
      %v2166 = vadd.f32 %v2135, %v2147
      %v2167 = vadd.f32 %v2136, %v2147
      %v2168 = vadd.f32 %v2137, %v2147
      %v2169 = vadd.f32 %v2138, %v2147
      %v2170 = vadd.f32 %v2139, %v2147
      %v2171 = vadd.f32 %v2140, %v2147
      %v2172 = vadd.f32 %v2141, %v2147
      %v2173 = vmax.f32 %v2149, 0.0
      %v2174 = vmax.f32 %v2150, 0.0
      %v2175 = vmax.f32 %v2151, 0.0
      %v2176 = vmax.f32 %v2152, 0.0
      %v2177 = vmax.f32 %v2153, 0.0
      %v2178 = vmax.f32 %v2154, 0.0
      %v2179 = vmax.f32 %v2155, 0.0
      %v2180 = vmax.f32 %v2156, 0.0
      %v2181 = vmax.f32 %v2157, 0.0
      %v2182 = vmax.f32 %v2158, 0.0
      %v2183 = vmax.f32 %v2159, 0.0
      %v2184 = vmax.f32 %v2160, 0.0
      %v2185 = vmax.f32 %v2161, 0.0
      %v2186 = vmax.f32 %v2162, 0.0
      %v2187 = vmax.f32 %v2163, 0.0
      %v2188 = vmax.f32 %v2164, 0.0
      %v2189 = vmax.f32 %v2165, 0.0
      %v2190 = vmax.f32 %v2166, 0.0
      %v2191 = vmax.f32 %v2167, 0.0
      %v2192 = vmax.f32 %v2168, 0.0
      %v2193 = vmax.f32 %v2169, 0.0
      %v2194 = vmax.f32 %v2170, 0.0
      %v2195 = vmax.f32 %v2171, 0.0
      %v2196 = vmax.f32 %v2172, 0.0
      %v2197 = vunpack.c.l.bf16 %v239
      %v2198 = vunpack.c.l.bf16 %v240
      %v2199 = vunpack.c.l.bf16 %v241
      %v2200 = vunpack.c.l.bf16 %v242
      %v2201 = vunpack.c.l.bf16 %v243
      %v2202 = vunpack.c.l.bf16 %v244
      %v2203 = vunpack.c.l.bf16 %v245
      %v2204 = vunpack.c.l.bf16 %v246
      %v2205 = vunpack.c.l.bf16 %v247
      %v2206 = vunpack.c.l.bf16 %v248
      %v2207 = vunpack.c.l.bf16 %v249
      %v2208 = vunpack.c.l.bf16 %v250
      %v2209 = vunpack.c.l.bf16 %v251
      %v2210 = vunpack.c.l.bf16 %v252
      %v2211 = vunpack.c.l.bf16 %v253
      %v2212 = vunpack.c.l.bf16 %v254
      %v2213 = vunpack.c.l.bf16 %v255
      %v2214 = vunpack.c.l.bf16 %v256
      %v2215 = vunpack.c.l.bf16 %v257
      %v2216 = vunpack.c.l.bf16 %v258
      %v2217 = vunpack.c.l.bf16 %v259
      %v2218 = vunpack.c.l.bf16 %v260
      %v2219 = vunpack.c.l.bf16 %v261
      %v2220 = vunpack.c.l.bf16 %v262
      %v2221 = vunpack.c.l.bf16 %v263
      %vm2247 = vcmask 1046528
      %v2248 = vrot.slane %v2197, 1
      %v2249 = vrot.slane %v2198, 1
      %v2250 = vsel %vm2247, %v2248, %v2249
      %v2251 = vrot.slane %v2199, 1
      %v2252 = vsel %vm2247, %v2249, %v2251
      %v2253 = vrot.slane %v2200, 1
      %v2254 = vsel %vm2247, %v2251, %v2253
      %v2255 = vrot.slane %v2201, 1
      %v2256 = vsel %vm2247, %v2253, %v2255
      %v2257 = vrot.slane %v2202, 1
      %v2258 = vsel %vm2247, %v2255, %v2257
      %v2259 = vrot.slane %v2203, 1
      %v2260 = vsel %vm2247, %v2257, %v2259
      %v2261 = vrot.slane %v2204, 1
      %v2262 = vsel %vm2247, %v2259, %v2261
      %v2263 = vrot.slane %v2205, 1
      %v2264 = vsel %vm2247, %v2261, %v2263
      %v2265 = vrot.slane %v2206, 1
      %v2266 = vsel %vm2247, %v2263, %v2265
      %v2267 = vrot.slane %v2207, 1
      %v2268 = vsel %vm2247, %v2265, %v2267
      %v2269 = vrot.slane %v2208, 1
      %v2270 = vsel %vm2247, %v2267, %v2269
      %v2271 = vrot.slane %v2209, 1
      %v2272 = vsel %vm2247, %v2269, %v2271
      %v2273 = vrot.slane %v2210, 1
      %v2274 = vsel %vm2247, %v2271, %v2273
      %v2275 = vrot.slane %v2211, 1
      %v2276 = vsel %vm2247, %v2273, %v2275
      %v2277 = vrot.slane %v2212, 1
      %v2278 = vsel %vm2247, %v2275, %v2277
      %v2279 = vrot.slane %v2213, 1
      %v2280 = vsel %vm2247, %v2277, %v2279
      %v2281 = vrot.slane %v2214, 1
      %v2282 = vsel %vm2247, %v2279, %v2281
      %v2283 = vrot.slane %v2215, 1
      %v2284 = vsel %vm2247, %v2281, %v2283
      %v2285 = vrot.slane %v2216, 1
      %v2286 = vsel %vm2247, %v2283, %v2285
      %v2287 = vrot.slane %v2217, 1
      %v2288 = vsel %vm2247, %v2285, %v2287
      %v2289 = vrot.slane %v2218, 1
      %v2290 = vsel %vm2247, %v2287, %v2289
      %v2291 = vrot.slane %v2219, 1
      %v2292 = vsel %vm2247, %v2289, %v2291
      %v2293 = vrot.slane %v2220, 1
      %v2294 = vsel %vm2247, %v2291, %v2293
      %v2295 = vrot.slane %v2221, 1
      %v2296 = vsel %vm2247, %v2293, %v2295
      %v2321 = vadd.f32 %v2173, %v2250
      %v2322 = vadd.f32 %v2174, %v2252
      %v2323 = vadd.f32 %v2175, %v2254
      %v2324 = vadd.f32 %v2176, %v2256
      %v2325 = vadd.f32 %v2177, %v2258
      %v2326 = vadd.f32 %v2178, %v2260
      %v2327 = vadd.f32 %v2179, %v2262
      %v2328 = vadd.f32 %v2180, %v2264
      %v2329 = vadd.f32 %v2181, %v2266
      %v2330 = vadd.f32 %v2182, %v2268
      %v2331 = vadd.f32 %v2183, %v2270
      %v2332 = vadd.f32 %v2184, %v2272
      %v2333 = vadd.f32 %v2185, %v2274
      %v2334 = vadd.f32 %v2186, %v2276
      %v2335 = vadd.f32 %v2187, %v2278
      %v2336 = vadd.f32 %v2188, %v2280
      %v2337 = vadd.f32 %v2189, %v2282
      %v2338 = vadd.f32 %v2190, %v2284
      %v2339 = vadd.f32 %v2191, %v2286
      %v2340 = vadd.f32 %v2192, %v2288
      %v2341 = vadd.f32 %v2193, %v2290
      %v2342 = vadd.f32 %v2194, %v2292
      %v2343 = vadd.f32 %v2195, %v2294
      %v2344 = vadd.f32 %v2196, %v2296
      %2345 = vst.msk [vmem:[%s233] sm:$0xff] %vm368, %v2321
      %2346 = vst.msk [vmem:[%s233 + $0x8] sm:$0xff] %vm368, %v2322
      %2347 = vst.msk [vmem:[%s233 + $0x10] sm:$0xff] %vm368, %v2323
      %2348 = vst.msk [vmem:[%s233 + $0x18] sm:$0xff] %vm368, %v2324
      %2349 = vst.msk [vmem:[%s233 + $0x20] sm:$0xff] %vm368, %v2325
      %2350 = vst.msk [vmem:[%s233 + $0x28] sm:$0xff] %vm368, %v2326
      %2351 = vst.msk [vmem:[%s233 + $0x30] sm:$0xff] %vm368, %v2327
      %2352 = vst.msk [vmem:[%s233 + $0x38] sm:$0xff] %vm368, %v2328
      %2353 = vst.msk [vmem:[%s233 + $0x40] sm:$0xff] %vm368, %v2329
      %2354 = vst.msk [vmem:[%s233 + $0x48] sm:$0xff] %vm368, %v2330
      %2355 = vst.msk [vmem:[%s233 + $0x50] sm:$0xff] %vm368, %v2331
      %2356 = vst.msk [vmem:[%s233 + $0x58] sm:$0xff] %vm368, %v2332
      %2357 = vst.msk [vmem:[%s233 + $0x60] sm:$0xff] %vm368, %v2333
      %2358 = vst.msk [vmem:[%s233 + $0x68] sm:$0xff] %vm368, %v2334
      %2359 = vst.msk [vmem:[%s233 + $0x70] sm:$0xff] %vm368, %v2335
      %2360 = vst.msk [vmem:[%s233 + $0x78] sm:$0xff] %vm368, %v2336
      %2361 = vst.msk [vmem:[%s233 + $0x80] sm:$0xff] %vm368, %v2337
      %2362 = vst.msk [vmem:[%s233 + $0x88] sm:$0xff] %vm368, %v2338
      %2363 = vst.msk [vmem:[%s233 + $0x90] sm:$0xff] %vm368, %v2339
      %2364 = vst.msk [vmem:[%s233 + $0x98] sm:$0xff] %vm368, %v2340
      %2365 = vst.msk [vmem:[%s233 + $0xa0] sm:$0xff] %vm368, %v2341
      %2366 = vst.msk [vmem:[%s233 + $0xa8] sm:$0xff] %vm368, %v2342
      %2367 = vst.msk [vmem:[%s233 + $0xb0] sm:$0xff] %vm368, %v2343
      %2368 = vst.msk [vmem:[%s233 + $0xb8] sm:$0xff] %vm368, %v2344
      %s2369 = smul.u32 24, %s20
      %p2370 = scmp.lt.s32.totalorder %s19, 1
      %s2371 = scalar_select %p2370, %s19, 1
      %p2372 = scmp.lt.s32.totalorder %s2369, 47
      %s2373 = scalar_select %p2372, %s2369, 47
      %s2374 = smul.addr %s2371, 48
      %s2375 = sadd.s32 %s2373, %s2374
      %s2376 = smul.addr %s2375, 8
      %s2377 = scalar_lea.vmem %s4, %s2376
      // Predicated region
      $region37: #{tpu_custom_call.1} parent=35 // pred_check
        %p2378 = pneg %p138
      $region38: #{tpu_custom_call.1} parent=35 // pred_check_branch
        %2380 = sbr.rel (%p2378) target = $region40
      $region39: #{tpu_custom_call.1} parent=35 // pred_region
        %s2381 = smul.u32 24, %s20
      $region40: #{tpu_custom_call.1} parent=35 // pred_fallthru
        _
    $region36: #{tpu_custom_call.1} parent=5 // pred_fallthru
      _
    %p2382 = scmp.le.s32.totalorder 2, %s10
    // Predicated region
    $region41: #{tpu_custom_call.1} parent=5 // pred_check
      %p2383 = pneg %p2382
    $region42: #{tpu_custom_call.1} parent=5 // pred_check_branch
      %2385 = sbr.rel (%p2383) target = $region44
    $region43: #{tpu_custom_call.1} parent=5 // pred_region
      %s2386 = ssub.s32 %s10, 2
      // Predicated region
      $region45: #{tpu_custom_call.1} parent=43 // pred_check
        %p2387 = pneg %p144
      $region46: #{tpu_custom_call.1} parent=43 // pred_check_branch
        %2389 = sbr.rel (%p2387) target = $region48
      $region47: #{tpu_custom_call.1} parent=43 // pred_region
        %s2390 = smul.u32 24, %s22
        %p2391 = scmp.lt.s32.totalorder %s21, 1
        %s2392 = scalar_select %p2391, %s21, 1
        %p2393 = scmp.lt.s32.totalorder %s2390, 47
        %s2394 = scalar_select %p2393, %s2390, 47
        %s2395 = smul.addr %s2392, 48
        %s2396 = sadd.s32 %s2394, %s2395
        %s2397 = smul.addr %s2396, 8
        %s2398 = scalar_lea.vmem %s4, %s2397
      $region48: #{tpu_custom_call.1} parent=43 // pred_fallthru
        _
    $region44: #{tpu_custom_call.1} parent=5 // pred_fallthru
      _
  $region6: #{tpu_custom_call.1} parent=0 // loop_footer
    %s14 = sadd.s32 1, %s10
  $region7: #{tpu_custom_call.1} parent=0 // loop_footer_branch
    %9 = sbr.rel target = $region3
  $region8: #{tpu_custom_call.1} parent=0 // loop_exit
    _

</llo_original>
